<compile_context>
chip_gen: v6e
topology: v6e:2x2x1
jax: 0.10.0
libtpu: 0.0.40
codegen_flags: <defaults>
</compile_context>

<pallas_src>
import math

import jax
import jax.numpy as jnp
from jax.experimental import pallas as pl
from jax.experimental.pallas import tpu as pltpu

_HI = jax.lax.Precision.HIGHEST


# ---------------------------------------------------------------------------
# Kernel bodies
# ---------------------------------------------------------------------------
def _modconv_body(x_ref, xup_ref, xdn_ref, noise_ref, s_ref, d_ref, w_ref,
                  b_ref, nscale_ref, xpad_ref):
    """ModulatedConv3x3 + Noise + LeakyReLU(0.2) for one (sample, row-tile).

      x_ref     : (1, R, W, Cin)    row tile of the input (f32 or bf16)
      xup_ref   : (1, 1, W, Cin)    row above the tile (index clamped at the top edge)
      xdn_ref   : (1, 1, W, Cin)    row below the tile (index clamped at the bottom edge)
      noise_ref : (1, R, W, 1)      per-pixel noise, lane-broadcast in-kernel
      s_ref     : (1, 1, Cin)       per-sample style modulation
      d_ref     : (1, 1, Cout)      per-sample demodulation factors
      w_ref     : (3, 3*Cin, Cout)  conv weight (per-kh im2col-along-W layout), bf16
      b_ref     : (1, Cout)         conv bias
      nscale_ref: (1, Cout)         Noise layer per-channel scale
      xpad_ref  : (R+2, W+16, Cin)  bf16 scratch; interior at rows [1,R+1), cols [8,8+W)

    Returns (R*W, Cout) f32 activations.
    """
    _, R, W, Cin = x_ref.shape
    Cout = b_ref.shape[-1]
    t = pl.program_id(1)
    last_t = pl.num_programs(1) - 1
    s = s_ref[...]                                            # (1, 1, Cin) f32

    # Zero only the border column strips every step (cols 7 and 8+W must be zero for
    # SAME padding; the aligned 8-wide strips are cheap).  Interior and halo rows are
    # fully overwritten below, so no full-buffer zeroing.
    zcol = jnp.zeros((R + 2, 8, Cin), jnp.bfloat16)
    xpad_ref[:, 0:8, :] = zcol
    xpad_ref[:, 8 + W:16 + W, :] = zcol

    # Modulated interior, cast to bf16 (MXU operand dtype) at store time.
    xpad_ref[1:R + 1, 8:8 + W, :] = (x_ref[0] * s).astype(jnp.bfloat16)

    # Halo rows: clamped neighbour rows, zeroed at the image boundary (SAME padding).
    up = (xup_ref[0, 0] * s[0]).astype(jnp.bfloat16)          # (W, Cin)
    dn = (xdn_ref[0, 0] * s[0]).astype(jnp.bfloat16)
    xpad_ref[0, 8:8 + W, :] = jnp.where(t == 0, jnp.zeros_like(up), up)
    xpad_ref[R + 1, 8:8 + W, :] = jnp.where(t == last_t, jnp.zeros_like(dn), dn)

    # 3x3 conv as 3 accumulating GEMMs (one per kh), K = 3*Cin, f32 accumulation.
    acc = jnp.zeros((R * W, Cout), jnp.float32)
    for kh in range(3):
        slab = jnp.concatenate(
            [xpad_ref[kh:kh + R, kw + 7:kw + 7 + W, :] for kw in range(3)],
            axis=-1)                                          # (R, W, 3*Cin) bf16
        acc = acc + jnp.dot(slab.reshape(R * W, 3 * Cin), w_ref[kh],
                            preferred_element_type=jnp.float32)

    y = acc * d_ref[0] + b_ref[...]                           # demod + bias
    y = y + nscale_ref[...] * noise_ref[0].reshape(R * W, 1)  # Noise (lane broadcast)
    return jnp.maximum(y, 0.2 * y)                            # LeakyReLU(0.2)


def modconv3x3_kernel(x_ref, xup_ref, xdn_ref, noise_ref, s_ref, d_ref, w_ref,
                      b_ref, nscale_ref, out_ref, xpad_ref):
    _, R, W, _ = x_ref.shape
    Cout = out_ref.shape[3]
    y = _modconv_body(x_ref, xup_ref, xdn_ref, noise_ref, s_ref, d_ref, w_ref,
                      b_ref, nscale_ref, xpad_ref)
    out_ref[0] = y.reshape(R, W, Cout).astype(out_ref.dtype)


def modconv3x3_to_rgb_kernel(x_ref, xup_ref, xdn_ref, noise_ref, rgb_ref, s_ref,
                             d_ref, w_ref, b_ref, nscale_ref, srgb_ref, wrgb_ref,
                             brgb_ref, feat_ref, rgb_out_ref, xpad_ref):
    """Last conv layer fused with ModulatedConv(1x1, no demod) to_rgb + residual add."""
    _, R, W, _ = x_ref.shape
    Cout = feat_ref.shape[3]
    Crgb = rgb_out_ref.shape[3]

    y = _modconv_body(x_ref, xup_ref, xdn_ref, noise_ref, s_ref, d_ref, w_ref,
                      b_ref, nscale_ref, xpad_ref)            # (R*W, Cout) f32
    feat_ref[0] = y.reshape(R, W, Cout).astype(feat_ref.dtype)

    # to_rgb: modulate (no demodulation), 1x1 conv, bias, residual rgb add.
    ym = (y * srgb_ref[0]).astype(wrgb_ref.dtype)             # bf16 MXU operand
    rgb = jnp.dot(ym, wrgb_ref[...], preferred_element_type=jnp.float32)
    rgb = rgb + brgb_ref[...] + rgb_ref[0].reshape(R * W, Crgb)
    rgb_out_ref[0] = rgb.reshape(R, W, Crgb).astype(rgb_out_ref.dtype)


# ---------------------------------------------------------------------------
# pallas_call wrappers
# ---------------------------------------------------------------------------
def _pick_row_tile(h):
    """Largest row-tile <= 16 that divides H and yields >= 2 tiles when possible."""
    for cand in (16, 8, 4, 2, 1):
        if h % cand == 0 and h // cand >= 2:
            return cand
    return h


def _vmem_limit_bytes():
    cap = 128 * 1024 * 1024
    try:
        info = pltpu.get_tpu_info()
        cap = int(getattr(info, "vmem_capacity_bytes", cap)) or cap
    except Exception:
        pass
    return (3 * cap) // 4                   # ~96 MiB on v5e/v6e, ~48 MiB on v7x


def _compiler_params():
    return pltpu.CompilerParams(dimension_semantics=("parallel", "parallel"),
                                vmem_limit_bytes=_vmem_limit_bytes())


def _halo_specs(H, W, Cin, rows):
    """x row tile + 1-row halo above/below via clamped index_maps."""
    return [
        pl.BlockSpec((1, rows, W, Cin), lambda n, t: (n, t, 0, 0)),
        pl.BlockSpec((1, 1, W, Cin),
                     lambda n, t: (n, jnp.maximum(t * rows - 1, 0), 0, 0)),
        pl.BlockSpec((1, 1, W, Cin),
                     lambda n, t: (n, jnp.minimum(t * rows + rows, H - 1), 0, 0)),
    ]


def modulated_conv3x3(x, noise, s, d, w_kh, conv_b, nscale, out_dtype):
    N, H, W, Cin = x.shape
    Cout = w_kh.shape[-1]
    rows = _pick_row_tile(H)
    grid = (N, H // rows)
    cost = pl.CostEstimate(
        flops=2 * N * H * W * 9 * Cin * Cout,
        transcendentals=0,
        bytes_accessed=2 * N * H * W * (Cin + Cout) + 4 * N * H * W
                       + 2 * 9 * Cin * Cout)
    return pl.pallas_call(
        modconv3x3_kernel,
        out_shape=jax.ShapeDtypeStruct((N, H, W, Cout), out_dtype),
        grid=grid,
        in_specs=_halo_specs(H, W, Cin, rows) + [
            pl.BlockSpec((1, rows, W, 1), lambda n, t: (n, t, 0, 0)),   # noise
            pl.BlockSpec((1, 1, Cin), lambda n, t: (n, 0, 0)),          # style s
            pl.BlockSpec((1, 1, Cout), lambda n, t: (n, 0, 0)),         # demod d
            pl.BlockSpec((3, 3 * Cin, Cout), lambda n, t: (0, 0, 0)),   # conv weight
            pl.BlockSpec((1, Cout), lambda n, t: (0, 0)),               # conv bias
            pl.BlockSpec((1, Cout), lambda n, t: (0, 0)),               # noise scale
        ],
        out_specs=pl.BlockSpec((1, rows, W, Cout), lambda n, t: (n, t, 0, 0)),
        scratch_shapes=[pltpu.VMEM((rows + 2, W + 16, Cin), jnp.bfloat16)],
        compiler_params=_compiler_params(),
        cost_estimate=cost,
    )(x, x, x, noise, s, d, w_kh, conv_b.reshape(1, Cout), nscale.reshape(1, Cout))


def modulated_conv3x3_to_rgb(x, noise, rgb, s, d, w_kh, conv_b, nscale,
                             s_rgb, w_rgb, rgb_b):
    N, H, W, Cin = x.shape
    Cout = w_kh.shape[-1]
    Crgb = w_rgb.shape[-1]
    rows = _pick_row_tile(H)
    grid = (N, H // rows)
    cost = pl.CostEstimate(
        flops=2 * N * H * W * (9 * Cin * Cout + Cout * Crgb),
        transcendentals=0,
        bytes_accessed=2 * N * H * W * Cin + 4 * N * H * W * (Cout + 2 * Crgb + 1)
                       + 2 * (9 * Cin * Cout + Cout * Crgb))
    return pl.pallas_call(
        modconv3x3_to_rgb_kernel,
        out_shape=(jax.ShapeDtypeStruct((N, H, W, Cout), jnp.float32),
                   jax.ShapeDtypeStruct((N, H, W, Crgb), jnp.float32)),
        grid=grid,
        in_specs=_halo_specs(H, W, Cin, rows) + [
            pl.BlockSpec((1, rows, W, 1), lambda n, t: (n, t, 0, 0)),    # noise
            pl.BlockSpec((1, rows, W, Crgb), lambda n, t: (n, t, 0, 0)), # previous rgb
            pl.BlockSpec((1, 1, Cin), lambda n, t: (n, 0, 0)),           # style s
            pl.BlockSpec((1, 1, Cout), lambda n, t: (n, 0, 0)),          # demod d
            pl.BlockSpec((3, 3 * Cin, Cout), lambda n, t: (0, 0, 0)),    # conv weight
            pl.BlockSpec((1, Cout), lambda n, t: (0, 0)),                # conv bias
            pl.BlockSpec((1, Cout), lambda n, t: (0, 0)),                # noise scale
            pl.BlockSpec((1, 1, Cout), lambda n, t: (n, 0, 0)),          # rgb style
            pl.BlockSpec((Cout, Crgb), lambda n, t: (0, 0)),             # rgb 1x1 weight
            pl.BlockSpec((1, Crgb), lambda n, t: (0, 0)),                # rgb bias
        ],
        out_specs=(pl.BlockSpec((1, rows, W, Cout), lambda n, t: (n, t, 0, 0)),
                   pl.BlockSpec((1, rows, W, Crgb), lambda n, t: (n, t, 0, 0))),
        scratch_shapes=[pltpu.VMEM((rows + 2, W + 16, Cin), jnp.bfloat16)],
        compiler_params=_compiler_params(),
        cost_estimate=cost,
    )(x, x, x, noise, rgb, s, d, w_kh, conv_b.reshape(1, Cout),
      nscale.reshape(1, Cout), s_rgb, w_rgb, rgb_b.reshape(1, Crgb))


def stylegan2_block_forward(params, maps_nchw, w_latent, rgb_nchw, noises,
                            n_layers=2, upsample=False):
    """Forward pass of StyleGAN2Block. Returns (rgb, maps), both NCHW."""
    N, _, H, W = maps_nchw.shape
    x = jnp.transpose(maps_nchw, (0, 2, 3, 1))                        # NCHW -> NHWC
    rgb = (jnp.zeros((N, H, W, 3), jnp.float32) if rgb_nchw is None
           else jnp.transpose(rgb_nchw, (0, 2, 3, 1)))
    if upsample:
        # TODO(synk): verify bilinear semantics vs torch F.interpolate(align_corners=False)
        # and fuse the fixed 2x2 stencil into the first conv kernel.
        H, W = 2 * H, 2 * W
        x = jax.image.resize(x, (N, H, W, x.shape[-1]), method="bilinear")
        rgb = jax.image.resize(rgb, (N, H, W, 3), method="bilinear")

    # to_rgb style (consumed by the fused last-layer kernel); no demodulation.
    s_rgb = jnp.dot(w_latent, params["rgb_A_w"], precision=_HI) + params["rgb_A_b"]
    s_rgb = s_rgb[:, None, :]                                          # (N, 1, Cout)
    w_rgb = params["rgb_w"].astype(jnp.bfloat16)

    for i in range(n_layers):
        cw = params[f"conv_w_{i}"]                                     # (3, 3, Cin, Cout)
        Cin, Cout = cw.shape[2], cw.shape[3]
        # Style modulation / demodulation hoisted to the wrapper (tiny XLA matmuls).
        s = jnp.dot(w_latent, params[f"A_w_{i}"], precision=_HI) + params[f"A_b_{i}"]
        wsq = jnp.sum(cw * cw, axis=(0, 1))                            # (Cin, Cout)
        d = jax.lax.rsqrt(jnp.dot(s * s, wsq, precision=_HI) + 1e-8)   # (N, Cout)
        s3, d3 = s[:, None, :], d[:, None, :]
        w_kh = cw.reshape(3, 3 * Cin, Cout).astype(jnp.bfloat16)       # per-kh layout
        if i < n_layers - 1:
            # Inter-layer features in bf16: the next layer feeds the MXU in bf16 anyway.
            x = modulated_conv3x3(x, noises[i], s3, d3, w_kh,
                                  params[f"conv_b_{i}"], params[f"nscale_{i}"],
                                  out_dtype=jnp.bfloat16)
        else:
            x, rgb = modulated_conv3x3_to_rgb(
                x, noises[i], rgb, s3, d3, w_kh,
                params[f"conv_b_{i}"], params[f"nscale_{i}"],
                s_rgb, w_rgb, params["rgb_b"])
    return jnp.transpose(rgb, (0, 3, 1, 2)), jnp.transpose(x, (0, 3, 1, 2))


# ---------------------------------------------------------------------------
# Deterministic parameter init (equal_lr / gain folded into the weights)
# ---------------------------------------------------------------------------
def init_params(key, in_ch, out_ch, noise_size, n_layers):
    leak = 0.2
    params = {}
    ks = iter(jax.random.split(key, 4 * n_layers + 4))
    c_in = in_ch
    for i in range(n_layers):
        fan_in = c_in * 3 * 3
        scale = math.sqrt(2.0) * math.sqrt(2.0 / (1.0 + leak ** 2)) / math.sqrt(fan_in)
        params[f"conv_w_{i}"] = scale * jax.random.normal(next(ks), (3, 3, c_in, out_ch), jnp.float32)
        params[f"conv_b_{i}"] = 0.1 * jax.random.normal(next(ks), (out_ch,), jnp.float32)
        params[f"A_w_{i}"] = jax.random.normal(next(ks), (noise_size, c_in), jnp.float32) / math.sqrt(noise_size)
        params[f"A_b_{i}"] = jnp.ones((c_in,), jnp.float32)            # style bias init = 1
        # torch init is zeros; use a small nonzero value so the noise path is exercised
        params[f"nscale_{i}"] = jnp.full((out_ch,), 0.05, jnp.float32)
        c_in = out_ch
    gain_rgb = 1.0 / math.sqrt(noise_size)
    scale = gain_rgb * math.sqrt(2.0 / (1.0 + leak ** 2)) / math.sqrt(out_ch)
    params["rgb_w"] = scale * jax.random.normal(next(ks), (out_ch, 3), jnp.float32)
    params["rgb_b"] = 0.1 * jax.random.normal(next(ks), (3,), jnp.float32)
    params["rgb_A_w"] = jax.random.normal(next(ks), (noise_size, out_ch), jnp.float32) / math.sqrt(noise_size)
    params["rgb_A_b"] = jnp.ones((out_ch,), jnp.float32)
    return params


# ---------------------------------------------------------------------------
# Pure-JAX reference (f32, lax.conv) for correctness check
# ---------------------------------------------------------------------------
def reference_forward(params, maps_nchw, w_latent, rgb_nchw, noises,
                      n_layers=2, upsample=False):
    N, _, H, W = maps_nchw.shape
    x = jnp.transpose(maps_nchw, (0, 2, 3, 1))
    rgb = (jnp.zeros((N, H, W, 3), jnp.float32) if rgb_nchw is None
           else jnp.transpose(rgb_nchw, (0, 2, 3, 1)))
    if upsample:
        H, W = 2 * H, 2 * W
        x = jax.image.resize(x, (N, H, W, x.shape[-1]), method="bilinear")
        rgb = jax.image.resize(rgb, (N, H, W, 3), method="bilinear")
    for i in range(n_layers):
        cw, cb = params[f"conv_w_{i}"], params[f"conv_b_{i}"]
        s = w_latent @ params[f"A_w_{i}"] + params[f"A_b_{i}"]              # (N, Cin)
        d = jax.lax.rsqrt((s ** 2) @ jnp.sum(cw ** 2, axis=(0, 1)) + 1e-8)  # (N, Cout)
        xm = x * s[:, None, None, :]
        y = jax.lax.conv_general_dilated(xm, cw, (1, 1), "SAME",
                                         dimension_numbers=("NHWC", "HWIO", "NHWC"),
                                         precision=_HI)
        y = y * d[:, None, None, :] + cb[None, None, None, :]
        y = y + params[f"nscale_{i}"][None, None, None, :] * noises[i]
        x = jnp.where(y >= 0, y, 0.2 * y)
    s = w_latent @ params["rgb_A_w"] + params["rgb_A_b"]
    y = jnp.einsum("nhwc,co->nhwo", x * s[:, None, None, :], params["rgb_w"],
                   precision=_HI) + params["rgb_b"][None, None, None, :]
    return jnp.transpose(rgb + y, (0, 3, 1, 2)), jnp.transpose(x, (0, 3, 1, 2))


# ---------------------------------------------------------------------------
if __name__ == "__main__":
    N, IN_CH, OUT_CH, NOISE_SIZE, HW, N_LAYERS = 2, 8, 8, 16, 16, 2
    key = jax.random.PRNGKey(0)
    kp, kx, kw, kr, kn0, kn1 = jax.random.split(key, 6)

    params = init_params(kp, IN_CH, OUT_CH, NOISE_SIZE, N_LAYERS)
    maps = jax.random.normal(kx, (N, IN_CH, HW, HW), jnp.float32)          # NCHW, like PyTorch
    w_lat = jax.random.normal(kw, (N, NOISE_SIZE), jnp.float32)
    rgb = jax.random.normal(kr, (N, 3, HW, HW), jnp.float32)
    # Noise layer draws torch.randn(N, 1, H, W); here stored NHWC as (N, H, W, 1)
    noises = [jax.random.normal(k, (N, HW, HW, 1), jnp.float32) for k in (kn0, kn1)]

    rgb_out, maps_out = stylegan2_block_forward(params, maps, w_lat, rgb, noises,
                                                n_layers=N_LAYERS, upsample=False)
    jax.block_until_ready((rgb_out, maps_out))

    rgb_ref, maps_ref = reference_forward(params, maps, w_lat, rgb, noises,
                                          n_layers=N_LAYERS, upsample=False)
    assert rgb_out.shape == (N, 3, HW, HW)
    assert maps_out.shape == (N, OUT_CH, HW, HW)
    # Tolerance accounts for bf16 MXU operands + bf16 inter-layer features vs f32 reference.
    assert jnp.allclose(maps_out, maps_ref, atol=5e-2, rtol=5e-2), "maps mismatch"
    assert jnp.allclose(rgb_out, rgb_ref, atol=5e-2, rtol=5e-2), "rgb mismatch"
    print("KERNEL_OK")
</pallas_src>

<mosaic_0001>
module attributes {stable_mosaic.version = 11 : i64} {
  func.func @modconv3x3_kernel(%arg0: i32, %arg1: i32, %arg2: memref<1x8x16x8xf32, #tpu.memory_space<vmem>>, %arg3: memref<1x1x16x8xf32, #tpu.memory_space<vmem>>, %arg4: memref<1x1x16x8xf32, #tpu.memory_space<vmem>>, %arg5: memref<1x8x16x1xf32, #tpu.memory_space<vmem>>, %arg6: memref<1x1x8xf32, #tpu.memory_space<vmem>>, %arg7: memref<1x1x8xf32, #tpu.memory_space<vmem>>, %arg8: memref<3x24x8xbf16, #tpu.memory_space<vmem>>, %arg9: memref<1x8xf32, #tpu.memory_space<vmem>>, %arg10: memref<1x8xf32, #tpu.memory_space<vmem>>, %arg11: memref<1x8x16x8xbf16, #tpu.memory_space<vmem>>, %arg12: memref<10x32x8xbf16, #tpu.memory_space<vmem>>) attributes {dimension_semantics = [#tpu.dimension_semantics<parallel>, #tpu.dimension_semantics<parallel>], iteration_bounds = array<i64: 2, 2>, scalar_prefetch = 0 : i64, scratch_operands = 1 : i64, tpu.core_type = #tpu.core_type<tc>, window_params = [{transform_indices = @transform_0, window_bounds = array<i64: 1, 8, 16, 8>}, {transform_indices = @transform_1, window_bounds = array<i64: 1, 1, 16, 8>}, {transform_indices = @transform_2, window_bounds = array<i64: 1, 1, 16, 8>}, {transform_indices = @transform_3, window_bounds = array<i64: 1, 8, 16, 1>}, {transform_indices = @transform_4, window_bounds = array<i64: 1, 1, 8>}, {transform_indices = @transform_5, window_bounds = array<i64: 1, 1, 8>}, {pipeline_mode = #tpu.pipeline_mode<synchronous>, transform_indices = @transform_6, window_bounds = array<i64: 3, 24, 8>}, {pipeline_mode = #tpu.pipeline_mode<synchronous>, transform_indices = @transform_7, window_bounds = array<i64: 1, 8>}, {pipeline_mode = #tpu.pipeline_mode<synchronous>, transform_indices = @transform_8, window_bounds = array<i64: 1, 8>}, {transform_indices = @transform_9, window_bounds = array<i64: 1, 8, 16, 8>}]} {
    %c0 = arith.constant 0 : index
    %c0_0 = arith.constant 0 : index
    %c0_1 = arith.constant 0 : index
    %0 = vector.load %arg6[%c0, %c0_0, %c0_1] : memref<1x1x8xf32, #tpu.memory_space<vmem>>, vector<1x1x8xf32>
    %cst = arith.constant 0.000000e+00 : bf16
    %1 = vector.broadcast %cst : bf16 to vector<10x8x8xbf16>
    %c0_2 = arith.constant 0 : index
    %c0_3 = arith.constant 0 : index
    %c0_4 = arith.constant 0 : index
    %2 = vector.load %arg12[%c0_2, %c0_3, %c0_4] : memref<10x32x8xbf16, #tpu.memory_space<vmem>>, vector<10x8x8xbf16>
    tpu.vector_store %arg12[%c0_2, %c0_3, %c0_4], %1 {strides = array<i32>} : memref<10x32x8xbf16, #tpu.memory_space<vmem>>, vector<10x8x8xbf16>,
    %c0_5 = arith.constant 0 : index
    %c24 = arith.constant 24 : index
    %c0_6 = arith.constant 0 : index
    %3 = vector.load %arg12[%c0_5, %c24, %c0_6] : memref<10x32x8xbf16, #tpu.memory_space<vmem>>, vector<10x8x8xbf16>
    tpu.vector_store %arg12[%c0_5, %c24, %c0_6], %1 {strides = array<i32>} : memref<10x32x8xbf16, #tpu.memory_space<vmem>>, vector<10x8x8xbf16>,
    %c0_7 = arith.constant 0 : index
    %c0_8 = arith.constant 0 : index
    %c0_9 = arith.constant 0 : index
    %c0_10 = arith.constant 0 : index
    %4 = vector.load %arg2[%c0_7, %c0_8, %c0_9, %c0_10] : memref<1x8x16x8xf32, #tpu.memory_space<vmem>>, vector<1x8x16x8xf32>
    %5 = vector.shape_cast %4 : vector<1x8x16x8xf32> to vector<8x16x8xf32>
    %6 = vector.broadcast %0 : vector<1x1x8xf32> to vector<8x16x8xf32>
    %7 = arith.mulf %5, %6 : vector<8x16x8xf32>
    %8 = arith.truncf %7 : vector<8x16x8xf32> to vector<8x16x8xbf16>
    %c1 = arith.constant 1 : index
    %c8 = arith.constant 8 : index
    %c0_11 = arith.constant 0 : index
    %9 = vector.load %arg12[%c1, %c8, %c0_11] : memref<10x32x8xbf16, #tpu.memory_space<vmem>>, vector<8x16x8xbf16>
    tpu.vector_store %arg12[%c1, %c8, %c0_11], %8 {strides = array<i32>} : memref<10x32x8xbf16, #tpu.memory_space<vmem>>, vector<8x16x8xbf16>,
    %c0_12 = arith.constant 0 : index
    %c0_13 = arith.constant 0 : index
    %c0_14 = arith.constant 0 : index
    %c0_15 = arith.constant 0 : index
    %10 = vector.load %arg3[%c0_12, %c0_13, %c0_14, %c0_15] : memref<1x1x16x8xf32, #tpu.memory_space<vmem>>, vector<1x1x16x8xf32>
    %11 = vector.shape_cast %10 : vector<1x1x16x8xf32> to vector<16x8xf32>
    %12 = vector.shape_cast %0 : vector<1x1x8xf32> to vector<1x8xf32>
    %13 = vector.broadcast %12 : vector<1x8xf32> to vector<16x8xf32>
    %14 = arith.mulf %11, %13 : vector<16x8xf32>
    %15 = arith.truncf %14 : vector<16x8xf32> to vector<16x8xbf16>
    %c0_16 = arith.constant 0 : index
    %c0_17 = arith.constant 0 : index
    %c0_18 = arith.constant 0 : index
    %c0_19 = arith.constant 0 : index
    %16 = vector.load %arg4[%c0_16, %c0_17, %c0_18, %c0_19] : memref<1x1x16x8xf32, #tpu.memory_space<vmem>>, vector<1x1x16x8xf32>
    %17 = vector.shape_cast %16 : vector<1x1x16x8xf32> to vector<16x8xf32>
    %18 = vector.shape_cast %0 : vector<1x1x8xf32> to vector<1x8xf32>
    %19 = vector.broadcast %18 : vector<1x8xf32> to vector<16x8xf32>
    %20 = arith.mulf %17, %19 : vector<16x8xf32>
    %21 = arith.truncf %20 : vector<16x8xf32> to vector<16x8xbf16>
    %c0_i32 = arith.constant 0 : i32
    %22 = arith.cmpi eq, %arg1, %c0_i32 : i32
    %cst_20 = arith.constant 0.000000e+00 : bf16
    %23 = vector.broadcast %cst_20 : bf16 to vector<16x8xbf16>
    %24 = arith.select %22, %23, %15 : vector<16x8xbf16>
    %c0_21 = arith.constant 0 : index
    %c8_22 = arith.constant 8 : index
    %c0_23 = arith.constant 0 : index
    %25 = vector.load %arg12[%c0_21, %c8_22, %c0_23] : memref<10x32x8xbf16, #tpu.memory_space<vmem>>, vector<1x16x8xbf16>
    %26 = vector.shape_cast %25 : vector<1x16x8xbf16> to vector<16x8xbf16>
    %27 = vector.shape_cast %24 : vector<16x8xbf16> to vector<1x16x8xbf16>
    tpu.vector_store %arg12[%c0_21, %c8_22, %c0_23], %27 {strides = array<i32>} : memref<10x32x8xbf16, #tpu.memory_space<vmem>>, vector<1x16x8xbf16>,
    %c1_i32 = arith.constant 1 : i32
    %28 = arith.cmpi eq, %arg1, %c1_i32 : i32
    %cst_24 = arith.constant 0.000000e+00 : bf16
    %29 = vector.broadcast %cst_24 : bf16 to vector<16x8xbf16>
    %30 = arith.select %28, %29, %21 : vector<16x8xbf16>
    %c9 = arith.constant 9 : index
    %c8_25 = arith.constant 8 : index
    %c0_26 = arith.constant 0 : index
    %31 = vector.load %arg12[%c9, %c8_25, %c0_26] : memref<10x32x8xbf16, #tpu.memory_space<vmem>>, vector<1x16x8xbf16>
    %32 = vector.shape_cast %31 : vector<1x16x8xbf16> to vector<16x8xbf16>
    %33 = vector.shape_cast %30 : vector<16x8xbf16> to vector<1x16x8xbf16>
    tpu.vector_store %arg12[%c9, %c8_25, %c0_26], %33 {strides = array<i32>} : memref<10x32x8xbf16, #tpu.memory_space<vmem>>, vector<1x16x8xbf16>,
    %cst_27 = arith.constant 0.000000e+00 : f32
    %34 = vector.broadcast %cst_27 : f32 to vector<128x8xf32>
    %c0_28 = arith.constant 0 : index
    %c7 = arith.constant 7 : index
    %c0_29 = arith.constant 0 : index
    %35 = vector.load %arg12[%c0_28, %c7, %c0_29] : memref<10x32x8xbf16, #tpu.memory_space<vmem>>, vector<8x16x8xbf16>
    %c0_30 = arith.constant 0 : index
    %c8_31 = arith.constant 8 : index
    %c0_32 = arith.constant 0 : index
    %36 = vector.load %arg12[%c0_30, %c8_31, %c0_32] : memref<10x32x8xbf16, #tpu.memory_space<vmem>>, vector<8x16x8xbf16>
    %c0_33 = arith.constant 0 : index
    %c9_34 = arith.constant 9 : index
    %c0_35 = arith.constant 0 : index
    %37 = vector.load %arg12[%c0_33, %c9_34, %c0_35] : memref<10x32x8xbf16, #tpu.memory_space<vmem>>, vector<8x16x8xbf16>
    %38 = tpu.concatenate %35, %36, %37 in 2 : vector<8x16x8xbf16>, vector<8x16x8xbf16>, vector<8x16x8xbf16> -> vector<8x16x24xbf16>
    %39 = vector.shape_cast %38 : vector<8x16x24xbf16> to vector<128x24xbf16>
    %c0_36 = arith.constant 0 : index
    %c0_37 = arith.constant 0 : index
    %c0_38 = arith.constant 0 : index
    %40 = vector.load %arg8[%c0_36, %c0_37, %c0_38] : memref<3x24x8xbf16, #tpu.memory_space<vmem>>, vector<1x24x8xbf16>
    %41 = vector.shape_cast %40 : vector<1x24x8xbf16> to vector<24x8xbf16>
    %cst_39 = arith.constant dense<0.000000e+00> : vector<128x8xf32>
    %42 = tpu.matmul %39, %41, %cst_39 {dimension_numbers = #tpu.dot_dimension_numbers<[1], [0], [0], [1], [0, 0, 1, 1], [], []>} : vector<128x24xbf16>, vector<24x8xbf16>, vector<128x8xf32> -> vector<128x8xf32>
    %43 = arith.addf %34, %42 : vector<128x8xf32>
    %c1_40 = arith.constant 1 : index
    %c7_41 = arith.constant 7 : index
    %c0_42 = arith.constant 0 : index
    %44 = vector.load %arg12[%c1_40, %c7_41, %c0_42] : memref<10x32x8xbf16, #tpu.memory_space<vmem>>, vector<8x16x8xbf16>
    %c1_43 = arith.constant 1 : index
    %c8_44 = arith.constant 8 : index
    %c0_45 = arith.constant 0 : index
    %45 = vector.load %arg12[%c1_43, %c8_44, %c0_45] : memref<10x32x8xbf16, #tpu.memory_space<vmem>>, vector<8x16x8xbf16>
    %c1_46 = arith.constant 1 : index
    %c9_47 = arith.constant 9 : index
    %c0_48 = arith.constant 0 : index
    %46 = vector.load %arg12[%c1_46, %c9_47, %c0_48] : memref<10x32x8xbf16, #tpu.memory_space<vmem>>, vector<8x16x8xbf16>
    %47 = tpu.concatenate %44, %45, %46 in 2 : vector<8x16x8xbf16>, vector<8x16x8xbf16>, vector<8x16x8xbf16> -> vector<8x16x24xbf16>
    %48 = vector.shape_cast %47 : vector<8x16x24xbf16> to vector<128x24xbf16>
    %c1_49 = arith.constant 1 : index
    %c0_50 = arith.constant 0 : index
    %c0_51 = arith.constant 0 : index
    %49 = vector.load %arg8[%c1_49, %c0_50, %c0_51] : memref<3x24x8xbf16, #tpu.memory_space<vmem>>, vector<1x24x8xbf16>
    %50 = vector.shape_cast %49 : vector<1x24x8xbf16> to vector<24x8xbf16>
    %cst_52 = arith.constant dense<0.000000e+00> : vector<128x8xf32>
    %51 = tpu.matmul %48, %50, %cst_52 {dimension_numbers = #tpu.dot_dimension_numbers<[1], [0], [0], [1], [0, 0, 1, 1], [], []>} : vector<128x24xbf16>, vector<24x8xbf16>, vector<128x8xf32> -> vector<128x8xf32>
    %52 = arith.addf %43, %51 : vector<128x8xf32>
    %c2 = arith.constant 2 : index
    %c7_53 = arith.constant 7 : index
    %c0_54 = arith.constant 0 : index
    %53 = vector.load %arg12[%c2, %c7_53, %c0_54] : memref<10x32x8xbf16, #tpu.memory_space<vmem>>, vector<8x16x8xbf16>
    %c2_55 = arith.constant 2 : index
    %c8_56 = arith.constant 8 : index
    %c0_57 = arith.constant 0 : index
    %54 = vector.load %arg12[%c2_55, %c8_56, %c0_57] : memref<10x32x8xbf16, #tpu.memory_space<vmem>>, vector<8x16x8xbf16>
    %c2_58 = arith.constant 2 : index
    %c9_59 = arith.constant 9 : index
    %c0_60 = arith.constant 0 : index
    %55 = vector.load %arg12[%c2_58, %c9_59, %c0_60] : memref<10x32x8xbf16, #tpu.memory_space<vmem>>, vector<8x16x8xbf16>
    %56 = tpu.concatenate %53, %54, %55 in 2 : vector<8x16x8xbf16>, vector<8x16x8xbf16>, vector<8x16x8xbf16> -> vector<8x16x24xbf16>
    %57 = vector.shape_cast %56 : vector<8x16x24xbf16> to vector<128x24xbf16>
    %c2_61 = arith.constant 2 : index
    %c0_62 = arith.constant 0 : index
    %c0_63 = arith.constant 0 : index
    %58 = vector.load %arg8[%c2_61, %c0_62, %c0_63] : memref<3x24x8xbf16, #tpu.memory_space<vmem>>, vector<1x24x8xbf16>
    %59 = vector.shape_cast %58 : vector<1x24x8xbf16> to vector<24x8xbf16>
    %cst_64 = arith.constant dense<0.000000e+00> : vector<128x8xf32>
    %60 = tpu.matmul %57, %59, %cst_64 {dimension_numbers = #tpu.dot_dimension_numbers<[1], [0], [0], [1], [0, 0, 1, 1], [], []>} : vector<128x24xbf16>, vector<24x8xbf16>, vector<128x8xf32> -> vector<128x8xf32>
    %61 = arith.addf %52, %60 : vector<128x8xf32>
    %c0_65 = arith.constant 0 : index
    %c0_66 = arith.constant 0 : index
    %c0_67 = arith.constant 0 : index
    %62 = vector.load %arg7[%c0_65, %c0_66, %c0_67] : memref<1x1x8xf32, #tpu.memory_space<vmem>>, vector<1x1x8xf32>
    %63 = vector.shape_cast %62 : vector<1x1x8xf32> to vector<1x8xf32>
    %64 = vector.broadcast %63 : vector<1x8xf32> to vector<128x8xf32>
    %65 = arith.mulf %61, %64 : vector<128x8xf32>
    %c0_68 = arith.constant 0 : index
    %c0_69 = arith.constant 0 : index
    %66 = vector.load %arg9[%c0_68, %c0_69] : memref<1x8xf32, #tpu.memory_space<vmem>>, vector<1x8xf32>
    %67 = vector.broadcast %66 : vector<1x8xf32> to vector<128x8xf32>
    %68 = arith.addf %65, %67 : vector<128x8xf32>
    %c0_70 = arith.constant 0 : index
    %c0_71 = arith.constant 0 : index
    %69 = vector.load %arg10[%c0_70, %c0_71] : memref<1x8xf32, #tpu.memory_space<vmem>>, vector<1x8xf32>
    %c0_72 = arith.constant 0 : index
    %c0_73 = arith.constant 0 : index
    %c0_74 = arith.constant 0 : index
    %c0_75 = arith.constant 0 : index
    %70 = vector.load %arg5[%c0_72, %c0_73, %c0_74, %c0_75] : memref<1x8x16x1xf32, #tpu.memory_space<vmem>>, vector<1x8x16x1xf32>
    %71 = vector.shape_cast %70 : vector<1x8x16x1xf32> to vector<8x16x1xf32>
    %72 = vector.shape_cast %71 : vector<8x16x1xf32> to vector<128x1xf32>
    %73 = vector.broadcast %69 : vector<1x8xf32> to vector<128x8xf32>
    %74 = vector.broadcast %72 : vector<128x1xf32> to vector<128x8xf32>
    %75 = arith.mulf %73, %74 : vector<128x8xf32>
    %76 = arith.addf %68, %75 : vector<128x8xf32>
    %cst_76 = arith.constant 2.000000e-01 : f32
    %77 = vector.broadcast %cst_76 : f32 to vector<128x8xf32>
    %78 = arith.mulf %77, %76 : vector<128x8xf32>
    %79 = arith.maximumf %76, %78 : vector<128x8xf32>
    %80 = vector.shape_cast %79 : vector<128x8xf32> to vector<8x16x8xf32>
    %81 = arith.truncf %80 : vector<8x16x8xf32> to vector<8x16x8xbf16>
    %c0_77 = arith.constant 0 : index
    %c0_78 = arith.constant 0 : index
    %c0_79 = arith.constant 0 : index
    %c0_80 = arith.constant 0 : index
    %82 = vector.load %arg11[%c0_77, %c0_78, %c0_79, %c0_80] : memref<1x8x16x8xbf16, #tpu.memory_space<vmem>>, vector<1x8x16x8xbf16>
    %83 = vector.shape_cast %82 : vector<1x8x16x8xbf16> to vector<8x16x8xbf16>
    %84 = vector.shape_cast %81 : vector<8x16x8xbf16> to vector<1x8x16x8xbf16>
    tpu.vector_store %arg11[%c0_77, %c0_78, %c0_79, %c0_80], %84 {strides = array<i32>} : memref<1x8x16x8xbf16, #tpu.memory_space<vmem>>, vector<1x8x16x8xbf16>,
    return
  }
  func.func @transform_0(%arg0: i32, %arg1: i32) -> (i32, i32, i32, i32) {
    %c0_i32 = arith.constant 0 : i32
    %c0_i32_0 = arith.constant 0 : i32
    %c0_i32_1 = arith.constant 0 : i32
    return %arg0, %arg1, %c0_i32, %c0_i32_0 : i32, i32, i32, i32
  }
  func.func @transform_1(%arg0: i32, %arg1: i32) -> (i32, i32, i32, i32) {
    %c8_i32 = arith.constant 8 : i32
    %0 = arith.muli %arg1, %c8_i32 : i32
    %c1_i32 = arith.constant 1 : i32
    %1 = arith.subi %0, %c1_i32 : i32
    %c0_i32 = arith.constant 0 : i32
    %2 = arith.maxsi %1, %c0_i32 : i32
    %c0_i32_0 = arith.constant 0 : i32
    %c0_i32_1 = arith.constant 0 : i32
    %c0_i32_2 = arith.constant 0 : i32
    return %arg0, %2, %c0_i32_0, %c0_i32_1 : i32, i32, i32, i32
  }
  func.func @transform_2(%arg0: i32, %arg1: i32) -> (i32, i32, i32, i32) {
    %c8_i32 = arith.constant 8 : i32
    %0 = arith.muli %arg1, %c8_i32 : i32
    %c8_i32_0 = arith.constant 8 : i32
    %1 = arith.addi %0, %c8_i32_0 : i32
    %c15_i32 = arith.constant 15 : i32
    %2 = arith.minsi %1, %c15_i32 : i32
    %c0_i32 = arith.constant 0 : i32
    %c0_i32_1 = arith.constant 0 : i32
    %c0_i32_2 = arith.constant 0 : i32
    return %arg0, %2, %c0_i32, %c0_i32_1 : i32, i32, i32, i32
  }
  func.func @transform_3(%arg0: i32, %arg1: i32) -> (i32, i32, i32, i32) {
    %c0_i32 = arith.constant 0 : i32
    %c0_i32_0 = arith.constant 0 : i32
    %c0_i32_1 = arith.constant 0 : i32
    return %arg0, %arg1, %c0_i32, %c0_i32_0 : i32, i32, i32, i32
  }
  func.func @transform_4(%arg0: i32, %arg1: i32) -> (i32, i32, i32) {
    %c0_i32 = arith.constant 0 : i32
    %c0_i32_0 = arith.constant 0 : i32
    %c0_i32_1 = arith.constant 0 : i32
    return %arg0, %c0_i32, %c0_i32_0 : i32, i32, i32
  }
  func.func @transform_5(%arg0: i32, %arg1: i32) -> (i32, i32, i32) {
    %c0_i32 = arith.constant 0 : i32
    %c0_i32_0 = arith.constant 0 : i32
    %c0_i32_1 = arith.constant 0 : i32
    return %arg0, %c0_i32, %c0_i32_0 : i32, i32, i32
  }
  func.func @transform_6(%arg0: i32, %arg1: i32) -> (i32, i32, i32) {
    %c0_i32 = arith.constant 0 : i32
    %c0_i32_0 = arith.constant 0 : i32
    %c0_i32_1 = arith.constant 0 : i32
    %c0_i32_2 = arith.constant 0 : i32
    return %c0_i32, %c0_i32_0, %c0_i32_1 : i32, i32, i32
  }
  func.func @transform_7(%arg0: i32, %arg1: i32) -> (i32, i32) {
    %c0_i32 = arith.constant 0 : i32
    %c0_i32_0 = arith.constant 0 : i32
    %c0_i32_1 = arith.constant 0 : i32
    return %c0_i32, %c0_i32_0 : i32, i32
  }
  func.func @transform_8(%arg0: i32, %arg1: i32) -> (i32, i32) {
    %c0_i32 = arith.constant 0 : i32
    %c0_i32_0 = arith.constant 0 : i32
    %c0_i32_1 = arith.constant 0 : i32
    return %c0_i32, %c0_i32_0 : i32, i32
  }
  func.func @transform_9(%arg0: i32, %arg1: i32) -> (i32, i32, i32, i32) {
    %c0_i32 = arith.constant 0 : i32
    %c0_i32_0 = arith.constant 0 : i32
    %c0_i32_1 = arith.constant 0 : i32
    return %arg0, %arg1, %c0_i32, %c0_i32_0 : i32, i32, i32, i32
  }
}

</mosaic_0001>

<llo_original>
// kernel: tpu_custom_call.1
$region0: #{tpu_custom_call.1}
  #allocation0 [shape = 'u32[]', space=smem, size = 0x4, offset = 0x4, fixed_abs, tag = 'smem constant byte address 0x4 - core index']
  #allocation1 [shape = 'u32[144,128]{1,0:T(1,128)}', space=vmem, size = 0x12000, scoped, tag = 'internal scratch']
  #allocation2 [shape = 'bf16[10,32,8]{2,1,0:T(8,128)(2,1)}', space=vmem, size = 0x14000, scoped, tag = 'scratch operand']
  %s0 = inlined_call_operand.vmem [shape: f32[2,16,16,8], index: 0, kind: input, shape index: {}]
  %s1 = inlined_call_operand.vmem [shape: f32[2,16,16,8], index: 1, kind: input, shape index: {}]
  %s2 = inlined_call_operand.vmem [shape: f32[2,16,16,8], index: 2, kind: input, shape index: {}]
  %s3 = inlined_call_operand.vmem [shape: f32[2,16,16,1], index: 3, kind: input, shape index: {}]
  %s4 = inlined_call_operand.vmem [shape: f32[2,1,8], index: 4, kind: input, shape index: {}]
  %s5 = inlined_call_operand.vmem [shape: f32[2,1,8], index: 5, kind: input, shape index: {}]
  %s6 = inlined_call_operand.vmem [shape: bf16[3,24,8], index: 6, kind: input, shape index: {}]
  %s7 = inlined_call_operand.vmem [shape: f32[1,8], index: 7, kind: input, shape index: {}]
  %s8 = inlined_call_operand.vmem [shape: f32[1,8], index: 8, kind: input, shape index: {}]
  %s9 = inlined_call_operand.vmem [shape: bf16[2,16,16,8], index: 9, kind: output, shape index: {}]
  %s10 = sld [smem:[#allocation0]]
  $region69: #{tpu_custom_call.1} parent=0
    _
  %s12 = ssub.s32 1, %s10
  %s13 = scalar_select 0, %s12, %s10
  loop: start=0, step=1, limit=6
  $region2: #{tpu_custom_call.1} parent=0 // loop_pre_header
    _
  $region3: #{tpu_custom_call.1} parent=0 // loop_header
    %s15 = sphi 0, %s19
    %p16 = scmp.ge.s32.totalorder %s15, 6
    %s22 = sphi 0, %s34
    %s23 = sphi 0, %s30
    %s24 = sphi 0, %s22
    %s25 = sphi 0, %s23
    %s26 = sphi 0, %s24
    %s27 = sphi 0, %s25
    %s39 = sphi 0, %s41
    %s42 = sphi 0, %s39
    %s43 = sphi 0, %s42
    %s59 = sphi 0, %s43
    %s75 = sphi 0, %s77
    %s78 = sphi 0, %s75
    %s79 = sphi 0, %s78
    %s95 = sphi 0, %s79
    %s111 = sphi 0, %s113
    %s114 = sphi 0, %s111
    %s115 = sphi 0, %s114
    %s131 = sphi 0, %s115
    %s139 = sphi 0, %s141
    %s142 = sphi 0, %s139
    %s143 = sphi 0, %s142
    %s159 = sphi 0, %s143
    %s165 = sphi 0, %s167
    %s168 = sphi 0, %s165
    %s169 = sphi 0, %s168
    %s185 = sphi 0, %s169
    %s191 = sphi 0, %s193
    %s194 = sphi 0, %s191
    %s195 = sphi 0, %s194
    %s211 = sphi 0, %s195
    %s215 = sphi 0, %s215
    %s217 = sphi 0, %s215
    %s218 = sphi 0, %s217
    %s232 = sphi 0, %s218
    %s236 = sphi 0, %s236
    %s238 = sphi 0, %s236
    %s239 = sphi 0, %s238
    %s253 = sphi 0, %s239
    %s257 = sphi 0, %s257
    %s259 = sphi 0, %s257
    %s260 = sphi 0, %s259
    %s274 = sphi 0, %s260
    %s282 = sphi 0, %s284
    %s285 = sphi 0, %s282
    %s286 = sphi 0, %s285
    %s302 = sphi 0, %s286
  $region4: #{tpu_custom_call.1} parent=0 // loop_header_branch
    %18 = sbr.rel (%p16) target = $region8
  $region5: #{tpu_custom_call.1} parent=0 // loop_body
    %s20 = ssub.s32 %s15, 1
    %s21 = ssub.s32 %s15, 2
    %s28 = sadd.s32 1, %s23
    %p29 = scmp.ge.s32.totalorder %s28, 2
    %s30 = scalar_select %p29, 0, %s28
    %s31 = sadd.s32 1, %s22
    %s32 = scalar_select %p29, %s31, %s22
    %p33 = scmp.ge.s32.totalorder %s32, 2
    %s34 = scalar_select %p33, 0, %s32
    %s35 = ssub.s32 %s22, %s34
    %s36 = ssub.s32 %s23, %s30
    %s37 = sor.u32 %s35, %s36
    %p38 = scmp.eq.s32.totalorder %s37, 0
    %s40 = sadd.s32 %s39, 1
    %s41 = scalar_select %p38, %s39, %s40
    %p44 = pneg %p38
    %p45 = scmp.eq.s32.totalorder %s15, 3
    %p46 = por %p44, %p45
    %p47 = scmp.ne.s32.totalorder %s39, %s42
    %p48 = scmp.eq.s32.totalorder %s15, 0
    %p49 = por %p47, %p48
    %p50 = scmp.ne.s32.totalorder %s39, %s42
    %p51 = scmp.eq.s32.totalorder %s20, 3
    %p52 = por %p50, %p51
    %p53 = scmp.ne.s32.totalorder %s42, %s43
    %p54 = scmp.eq.s32.totalorder %s20, 0
    %p55 = por %p53, %p54
    %p56 = scmp.ne.s32.totalorder %s42, %s43
    %p57 = scmp.eq.s32.totalorder %s21, 3
    %p58 = por %p56, %p57
    %p60 = scmp.ne.s32.totalorder %s43, %s59
    %p61 = scmp.eq.s32.totalorder %s21, 0
    %p62 = por %p60, %p61
    %s63 = smul.u32 %s23, 8
    %s64 = ssub.s32 %s63, 1
    %p65 = scmp.gt.s32.totalorder %s64, 0
    %s66 = scalar_select %p65, %s64, 0
    %s67 = smul.u32 %s30, 8
    %s68 = ssub.s32 %s67, 1
    %p69 = scmp.gt.s32.totalorder %s68, 0
    %s70 = scalar_select %p69, %s68, 0
    %s71 = ssub.s32 %s22, %s34
    %s72 = ssub.s32 %s66, %s70
    %s73 = sor.u32 %s71, %s72
    %p74 = scmp.eq.s32.totalorder %s73, 0
    %s76 = sadd.s32 %s75, 1
    %s77 = scalar_select %p74, %s75, %s76
    %p80 = pneg %p74
    %p81 = scmp.eq.s32.totalorder %s15, 3
    %p82 = por %p80, %p81
    %p83 = scmp.ne.s32.totalorder %s75, %s78
    %p84 = scmp.eq.s32.totalorder %s15, 0
    %p85 = por %p83, %p84
    %p86 = scmp.ne.s32.totalorder %s75, %s78
    %p87 = scmp.eq.s32.totalorder %s20, 3
    %p88 = por %p86, %p87
    %p89 = scmp.ne.s32.totalorder %s78, %s79
    %p90 = scmp.eq.s32.totalorder %s20, 0
    %p91 = por %p89, %p90
    %p92 = scmp.ne.s32.totalorder %s78, %s79
    %p93 = scmp.eq.s32.totalorder %s21, 3
    %p94 = por %p92, %p93
    %p96 = scmp.ne.s32.totalorder %s79, %s95
    %p97 = scmp.eq.s32.totalorder %s21, 0
    %p98 = por %p96, %p97
    %s99 = smul.u32 %s23, 8
    %s100 = sadd.s32 %s99, 8
    %p101 = scmp.lt.s32.totalorder %s100, 15
    %s102 = scalar_select %p101, %s100, 15
    %s103 = smul.u32 %s30, 8
    %s104 = sadd.s32 %s103, 8
    %p105 = scmp.lt.s32.totalorder %s104, 15
    %s106 = scalar_select %p105, %s104, 15
    %s107 = ssub.s32 %s22, %s34
    %s108 = ssub.s32 %s102, %s106
    %s109 = sor.u32 %s107, %s108
    %p110 = scmp.eq.s32.totalorder %s109, 0
    %s112 = sadd.s32 %s111, 1
    %s113 = scalar_select %p110, %s111, %s112
    %p116 = pneg %p110
    %p117 = scmp.eq.s32.totalorder %s15, 3
    %p118 = por %p116, %p117
    %p119 = scmp.ne.s32.totalorder %s111, %s114
    %p120 = scmp.eq.s32.totalorder %s15, 0
    %p121 = por %p119, %p120
    %p122 = scmp.ne.s32.totalorder %s111, %s114
    %p123 = scmp.eq.s32.totalorder %s20, 3
    %p124 = por %p122, %p123
    %p125 = scmp.ne.s32.totalorder %s114, %s115
    %p126 = scmp.eq.s32.totalorder %s20, 0
    %p127 = por %p125, %p126
    %p128 = scmp.ne.s32.totalorder %s114, %s115
    %p129 = scmp.eq.s32.totalorder %s21, 3
    %p130 = por %p128, %p129
    %p132 = scmp.ne.s32.totalorder %s115, %s131
    %p133 = scmp.eq.s32.totalorder %s21, 0
    %p134 = por %p132, %p133
    %s135 = ssub.s32 %s22, %s34
    %s136 = ssub.s32 %s23, %s30
    %s137 = sor.u32 %s135, %s136
    %p138 = scmp.eq.s32.totalorder %s137, 0
    %s140 = sadd.s32 %s139, 1
    %s141 = scalar_select %p138, %s139, %s140
    %p144 = pneg %p138
    %p145 = scmp.eq.s32.totalorder %s15, 3
    %p146 = por %p144, %p145
    %p147 = scmp.ne.s32.totalorder %s139, %s142
    %p148 = scmp.eq.s32.totalorder %s15, 0
    %p149 = por %p147, %p148
    %p150 = scmp.ne.s32.totalorder %s139, %s142
    %p151 = scmp.eq.s32.totalorder %s20, 3
    %p152 = por %p150, %p151
    %p153 = scmp.ne.s32.totalorder %s142, %s143
    %p154 = scmp.eq.s32.totalorder %s20, 0
    %p155 = por %p153, %p154
    %p156 = scmp.ne.s32.totalorder %s142, %s143
    %p157 = scmp.eq.s32.totalorder %s21, 3
    %p158 = por %p156, %p157
    %p160 = scmp.ne.s32.totalorder %s143, %s159
    %p161 = scmp.eq.s32.totalorder %s21, 0
    %p162 = por %p160, %p161
    %s163 = ssub.s32 %s22, %s34
    %p164 = scmp.eq.s32.totalorder %s163, 0
    %s166 = sadd.s32 %s165, 1
    %s167 = scalar_select %p164, %s165, %s166
    %p170 = pneg %p164
    %p171 = scmp.eq.s32.totalorder %s15, 3
    %p172 = por %p170, %p171
    %p173 = scmp.ne.s32.totalorder %s165, %s168
    %p174 = scmp.eq.s32.totalorder %s15, 0
    %p175 = por %p173, %p174
    %p176 = scmp.ne.s32.totalorder %s165, %s168
    %p177 = scmp.eq.s32.totalorder %s20, 3
    %p178 = por %p176, %p177
    %p179 = scmp.ne.s32.totalorder %s168, %s169
    %p180 = scmp.eq.s32.totalorder %s20, 0
    %p181 = por %p179, %p180
    %p182 = scmp.ne.s32.totalorder %s168, %s169
    %p183 = scmp.eq.s32.totalorder %s21, 3
    %p184 = por %p182, %p183
    %p186 = scmp.ne.s32.totalorder %s169, %s185
    %p187 = scmp.eq.s32.totalorder %s21, 0
    %p188 = por %p186, %p187
    %s189 = ssub.s32 %s22, %s34
    %p190 = scmp.eq.s32.totalorder %s189, 0
    %s192 = sadd.s32 %s191, 1
    %s193 = scalar_select %p190, %s191, %s192
    %p196 = pneg %p190
    %p197 = scmp.eq.s32.totalorder %s15, 3
    %p198 = por %p196, %p197
    %p199 = scmp.ne.s32.totalorder %s191, %s194
    %p200 = scmp.eq.s32.totalorder %s15, 0
    %p201 = por %p199, %p200
    %p202 = scmp.ne.s32.totalorder %s191, %s194
    %p203 = scmp.eq.s32.totalorder %s20, 3
    %p204 = por %p202, %p203
    %p205 = scmp.ne.s32.totalorder %s194, %s195
    %p206 = scmp.eq.s32.totalorder %s20, 0
    %p207 = por %p205, %p206
    %p208 = scmp.ne.s32.totalorder %s194, %s195
    %p209 = scmp.eq.s32.totalorder %s21, 3
    %p210 = por %p208, %p209
    %p212 = scmp.ne.s32.totalorder %s195, %s211
    %p213 = scmp.eq.s32.totalorder %s21, 0
    %p214 = por %p212, %p213
    %s216 = sadd.s32 %s215, 1
    %p219 = scmp.eq.s32.totalorder %s15, 3
    %p220 = scmp.ne.s32.totalorder %s215, %s217
    %p221 = scmp.eq.s32.totalorder %s15, 0
    %p222 = por %p220, %p221
    %p223 = scmp.ne.s32.totalorder %s215, %s217
    %p224 = scmp.eq.s32.totalorder %s20, 3
    %p225 = por %p223, %p224
    %p226 = scmp.ne.s32.totalorder %s217, %s218
    %p227 = scmp.eq.s32.totalorder %s20, 0
    %p228 = por %p226, %p227
    %p229 = scmp.ne.s32.totalorder %s217, %s218
    %p230 = scmp.eq.s32.totalorder %s21, 3
    %p231 = por %p229, %p230
    %p233 = scmp.ne.s32.totalorder %s218, %s232
    %p234 = scmp.eq.s32.totalorder %s21, 0
    %p235 = por %p233, %p234
    %s237 = sadd.s32 %s236, 1
    %p240 = scmp.eq.s32.totalorder %s15, 3
    %p241 = scmp.ne.s32.totalorder %s236, %s238
    %p242 = scmp.eq.s32.totalorder %s15, 0
    %p243 = por %p241, %p242
    %p244 = scmp.ne.s32.totalorder %s236, %s238
    %p245 = scmp.eq.s32.totalorder %s20, 3
    %p246 = por %p244, %p245
    %p247 = scmp.ne.s32.totalorder %s238, %s239
    %p248 = scmp.eq.s32.totalorder %s20, 0
    %p249 = por %p247, %p248
    %p250 = scmp.ne.s32.totalorder %s238, %s239
    %p251 = scmp.eq.s32.totalorder %s21, 3
    %p252 = por %p250, %p251
    %p254 = scmp.ne.s32.totalorder %s239, %s253
    %p255 = scmp.eq.s32.totalorder %s21, 0
    %p256 = por %p254, %p255
    %s258 = sadd.s32 %s257, 1
    %p261 = scmp.eq.s32.totalorder %s15, 3
    %p262 = scmp.ne.s32.totalorder %s257, %s259
    %p263 = scmp.eq.s32.totalorder %s15, 0
    %p264 = por %p262, %p263
    %p265 = scmp.ne.s32.totalorder %s257, %s259
    %p266 = scmp.eq.s32.totalorder %s20, 3
    %p267 = por %p265, %p266
    %p268 = scmp.ne.s32.totalorder %s259, %s260
    %p269 = scmp.eq.s32.totalorder %s20, 0
    %p270 = por %p268, %p269
    %p271 = scmp.ne.s32.totalorder %s259, %s260
    %p272 = scmp.eq.s32.totalorder %s21, 3
    %p273 = por %p271, %p272
    %p275 = scmp.ne.s32.totalorder %s260, %s274
    %p276 = scmp.eq.s32.totalorder %s21, 0
    %p277 = por %p275, %p276
    %s278 = ssub.s32 %s22, %s34
    %s279 = ssub.s32 %s23, %s30
    %s280 = sor.u32 %s278, %s279
    %p281 = scmp.eq.s32.totalorder %s280, 0
    %s283 = sadd.s32 %s282, 1
    %s284 = scalar_select %p281, %s282, %s283
    %p287 = pneg %p281
    %p288 = scmp.eq.s32.totalorder %s15, 3
    %p289 = por %p287, %p288
    %p290 = scmp.ne.s32.totalorder %s282, %s285
    %p291 = scmp.eq.s32.totalorder %s15, 0
    %p292 = por %p290, %p291
    %p293 = scmp.ne.s32.totalorder %s282, %s285
    %p294 = scmp.eq.s32.totalorder %s20, 3
    %p295 = por %p293, %p294
    %p296 = scmp.ne.s32.totalorder %s285, %s286
    %p297 = scmp.eq.s32.totalorder %s20, 0
    %p298 = por %p296, %p297
    %p299 = scmp.ne.s32.totalorder %s285, %s286
    %p300 = scmp.eq.s32.totalorder %s21, 3
    %p301 = por %p299, %p300
    %p303 = scmp.ne.s32.totalorder %s286, %s302
    %p304 = scmp.eq.s32.totalorder %s21, 0
    %p305 = por %p303, %p304
    %p306 = scmp.le.s32.totalorder 1, %s15
    %p307 = scmp.lt.s32.totalorder %s15, 5
    %p308 = pnand %p306, %p307
    %p309 = pneg %p308
    // Predicated region
    $region9: #{tpu_custom_call.1} parent=5 // pred_check
      _
    $region10: #{tpu_custom_call.1} parent=5 // pred_check_branch
      %311 = sbr.rel (%p308) target = $region12
    $region11: #{tpu_custom_call.1} parent=5 // pred_region
      %s312 = ssub.s32 %s15, 1
      // Predicated region
      $region13: #{tpu_custom_call.1} parent=11 // pred_check
        %p313 = pneg %p228
      $region14: #{tpu_custom_call.1} parent=11 // pred_check_branch
        %315 = sbr.rel (%p313) target = $region16
      $region15: #{tpu_custom_call.1} parent=11 // pred_region
        _
      $region16: #{tpu_custom_call.1} parent=11 // pred_fallthru
        _
      // Predicated region
      $region17: #{tpu_custom_call.1} parent=11 // pred_check
        %p316 = pneg %p249
      $region18: #{tpu_custom_call.1} parent=11 // pred_check_branch
        %318 = sbr.rel (%p316) target = $region20
      $region19: #{tpu_custom_call.1} parent=11 // pred_region
        _
      $region20: #{tpu_custom_call.1} parent=11 // pred_fallthru
        _
      // Predicated region
      $region21: #{tpu_custom_call.1} parent=11 // pred_check
        %p319 = pneg %p270
      $region22: #{tpu_custom_call.1} parent=11 // pred_check_branch
        %321 = sbr.rel (%p319) target = $region24
      $region23: #{tpu_custom_call.1} parent=11 // pred_region
        _
      $region24: #{tpu_custom_call.1} parent=11 // pred_fallthru
        _
    $region12: #{tpu_custom_call.1} parent=5 // pred_fallthru
      _
    %p322 = scmp.lt.s32.totalorder %s15, 4
    // Predicated region
    $region25: #{tpu_custom_call.1} parent=5 // pred_check
      %p323 = pneg %p322
    $region26: #{tpu_custom_call.1} parent=5 // pred_check_branch
      %325 = sbr.rel (%p323) target = $region28
    $region27: #{tpu_custom_call.1} parent=5 // pred_region
      // Predicated region
      $region29: #{tpu_custom_call.1} parent=27 // pred_check
        %p326 = pneg %p49
      $region30: #{tpu_custom_call.1} parent=27 // pred_check_branch
        %328 = sbr.rel (%p326) target = $region32
      $region31: #{tpu_custom_call.1} parent=27 // pred_region
        %s329 = smul.u32 8, %s23
        %p330 = scmp.lt.s32.totalorder %s22, 1
        %s331 = scalar_select %p330, %s22, 1
        %p332 = scmp.lt.s32.totalorder %s329, 15
        %s333 = scalar_select %p332, %s329, 15
        %s334 = smul.addr %s333, 2
        %s335 = smul.addr %s331, 32
        %s336 = sadd.s32 %s334, %s335
        %s337 = smul.addr %s336, 8
        %s338 = scalar_lea.vmem %s0, %s337
        %s339 = smul.u32 8, %s23
      $region32: #{tpu_custom_call.1} parent=27 // pred_fallthru
        _
      // Predicated region
      $region33: #{tpu_custom_call.1} parent=27 // pred_check
        %p340 = pneg %p85
      $region34: #{tpu_custom_call.1} parent=27 // pred_check_branch
        %342 = sbr.rel (%p340) target = $region36
      $region35: #{tpu_custom_call.1} parent=27 // pred_region
        %s343 = smul.u32 %s23, 8
        %s344 = ssub.s32 %s343, 1
        %p345 = scmp.gt.s32.totalorder %s344, 0
        %s346 = scalar_select %p345, %s344, 0
        %p347 = scmp.lt.s32.totalorder %s22, 1
        %s348 = scalar_select %p347, %s22, 1
        %p349 = scmp.lt.s32.totalorder %s346, 15
        %s350 = scalar_select %p349, %s346, 15
        %s351 = smul.addr %s350, 2
        %s352 = smul.addr %s348, 32
        %s353 = sadd.s32 %s351, %s352
        %s354 = smul.addr %s353, 8
        %s355 = scalar_lea.vmem %s1, %s354
        %s356 = smul.u32 %s23, 8
        %s357 = ssub.s32 %s356, 1
        %p358 = scmp.gt.s32.totalorder %s357, 0
        %s359 = scalar_select %p358, %s357, 0
      $region36: #{tpu_custom_call.1} parent=27 // pred_fallthru
        _
      // Predicated region
      $region37: #{tpu_custom_call.1} parent=27 // pred_check
        %p360 = pneg %p121
      $region38: #{tpu_custom_call.1} parent=27 // pred_check_branch
        %362 = sbr.rel (%p360) target = $region40
      $region39: #{tpu_custom_call.1} parent=27 // pred_region
        %s363 = smul.u32 %s23, 8
        %s364 = sadd.s32 %s363, 8
        %p365 = scmp.lt.s32.totalorder %s364, 15
        %s366 = scalar_select %p365, %s364, 15
        %p367 = scmp.lt.s32.totalorder %s22, 1
        %s368 = scalar_select %p367, %s22, 1
        %p369 = scmp.lt.s32.totalorder %s366, 15
        %s370 = scalar_select %p369, %s366, 15
        %s371 = smul.addr %s370, 2
        %s372 = smul.addr %s368, 32
        %s373 = sadd.s32 %s371, %s372
        %s374 = smul.addr %s373, 8
        %s375 = scalar_lea.vmem %s2, %s374
        %s376 = smul.u32 %s23, 8
        %s377 = sadd.s32 %s376, 8
        %p378 = scmp.lt.s32.totalorder %s377, 15
        %s379 = scalar_select %p378, %s377, 15
      $region40: #{tpu_custom_call.1} parent=27 // pred_fallthru
        _
      // Predicated region
      $region41: #{tpu_custom_call.1} parent=27 // pred_check
        %p380 = pneg %p149
      $region42: #{tpu_custom_call.1} parent=27 // pred_check_branch
        %382 = sbr.rel (%p380) target = $region44
      $region43: #{tpu_custom_call.1} parent=27 // pred_region
        %s383 = smul.u32 8, %s23
        %p384 = scmp.lt.s32.totalorder %s22, 1
        %s385 = scalar_select %p384, %s22, 1
        %p386 = scmp.lt.s32.totalorder %s383, 15
        %s387 = scalar_select %p386, %s383, 15
        %s388 = smul.addr %s387, 2
        %s389 = smul.addr %s385, 32
        %s390 = sadd.s32 %s388, %s389
        %s391 = smul.addr %s390, 8
        %s392 = scalar_lea.vmem %s3, %s391
        %s393 = smul.u32 8, %s23
      $region44: #{tpu_custom_call.1} parent=27 // pred_fallthru
        _
      // Predicated region
      $region45: #{tpu_custom_call.1} parent=27 // pred_check
        %p394 = pneg %p175
      $region46: #{tpu_custom_call.1} parent=27 // pred_check_branch
        %396 = sbr.rel (%p394) target = $region48
      $region47: #{tpu_custom_call.1} parent=27 // pred_region
        %p397 = scmp.lt.s32.totalorder %s22, 1
        %s398 = scalar_select %p397, %s22, 1
        %s399 = scalar_lea.vmem %s4, %s398
      $region48: #{tpu_custom_call.1} parent=27 // pred_fallthru
        _
      // Predicated region
      $region49: #{tpu_custom_call.1} parent=27 // pred_check
        %p400 = pneg %p201
      $region50: #{tpu_custom_call.1} parent=27 // pred_check_branch
        %402 = sbr.rel (%p400) target = $region52
      $region51: #{tpu_custom_call.1} parent=27 // pred_region
        %p403 = scmp.lt.s32.totalorder %s22, 1
        %s404 = scalar_select %p403, %s22, 1
        %s405 = scalar_lea.vmem %s5, %s404
      $region52: #{tpu_custom_call.1} parent=27 // pred_fallthru
        _
    $region28: #{tpu_custom_call.1} parent=5 // pred_fallthru
      _
    %p406 = scmp.le.s32.totalorder 1, %s15
    %p407 = scmp.lt.s32.totalorder %s15, 5
    %p408 = pnand %p406, %p407
    %p409 = pneg %p408
    // Predicated region
    $region53: #{tpu_custom_call.1} parent=5 // pred_check
      _
    $region54: #{tpu_custom_call.1} parent=5 // pred_check_branch
      %411 = sbr.rel (%p408) target = $region56
    $region55: #{tpu_custom_call.1} parent=5 // pred_region
      %s412 = ssub.s32 %s15, 1
      %s413 = smul.u32 8, %s25
      %p414 = scmp.lt.s32.totalorder %s24, 1
      %s415 = scalar_select %p414, %s24, 1
      %p416 = scmp.lt.s32.totalorder %s413, 15
      %s417 = scalar_select %p416, %s413, 15
      %s418 = smul.addr %s417, 2
      %s419 = smul.addr %s415, 32
      %s420 = sadd.s32 %s418, %s419
      %s421 = smul.addr %s420, 8
      %s422 = scalar_lea.vmem %s0, %s421
      %p423 = pneg %p55
      %p424 = pneg %p52
      %s425 = smul.u32 %s25, 8
      %s426 = ssub.s32 %s425, 1
      %p427 = scmp.gt.s32.totalorder %s426, 0
      %s428 = scalar_select %p427, %s426, 0
      %p429 = scmp.lt.s32.totalorder %s24, 1
      %s430 = scalar_select %p429, %s24, 1
      %p431 = scmp.lt.s32.totalorder %s428, 15
      %s432 = scalar_select %p431, %s428, 15
      %s433 = smul.addr %s432, 2
      %s434 = smul.addr %s430, 32
      %s435 = sadd.s32 %s433, %s434
      %s436 = smul.addr %s435, 8
      %s437 = scalar_lea.vmem %s1, %s436
      %p438 = pneg %p91
      %p439 = pneg %p88
      %s440 = smul.u32 %s25, 8
      %s441 = sadd.s32 %s440, 8
      %p442 = scmp.lt.s32.totalorder %s441, 15
      %s443 = scalar_select %p442, %s441, 15
      %p444 = scmp.lt.s32.totalorder %s24, 1
      %s445 = scalar_select %p444, %s24, 1
      %p446 = scmp.lt.s32.totalorder %s443, 15
      %s447 = scalar_select %p446, %s443, 15
      %s448 = smul.addr %s447, 2
      %s449 = smul.addr %s445, 32
      %s450 = sadd.s32 %s448, %s449
      %s451 = smul.addr %s450, 8
      %s452 = scalar_lea.vmem %s2, %s451
      %p453 = pneg %p127
      %p454 = pneg %p124
      %s455 = smul.u32 8, %s25
      %p456 = scmp.lt.s32.totalorder %s24, 1
      %s457 = scalar_select %p456, %s24, 1
      %p458 = scmp.lt.s32.totalorder %s455, 15
      %s459 = scalar_select %p458, %s455, 15
      %s460 = smul.addr %s459, 2
      %s461 = smul.addr %s457, 32
      %s462 = sadd.s32 %s460, %s461
      %s463 = smul.addr %s462, 8
      %s464 = scalar_lea.vmem %s3, %s463
      %p465 = pneg %p155
      %p466 = pneg %p152
      %p467 = scmp.lt.s32.totalorder %s24, 1
      %s468 = scalar_select %p467, %s24, 1
      %s469 = scalar_lea.vmem %s4, %s468
      %p470 = pneg %p181
      %p471 = pneg %p178
      %p472 = scmp.lt.s32.totalorder %s24, 1
      %s473 = scalar_select %p472, %s24, 1
      %s474 = scalar_lea.vmem %s5, %s473
      %p475 = pneg %p207
      %p476 = pneg %p204
      %p477 = pneg %p228
      %p478 = pneg %p225
      %p479 = pneg %p249
      %p480 = pneg %p246
      %p481 = pneg %p270
      %p482 = pneg %p267
      %p483 = pneg %p298
      %p484 = pneg %p295
      %s485 = smul.u32 8, %s25
      %p486 = scmp.lt.s32.totalorder %s24, 1
      %s487 = scalar_select %p486, %s24, 1
      %p488 = scmp.lt.s32.totalorder %s485, 15
      %s489 = scalar_select %p488, %s485, 15
      %s490 = smul.addr %s489, 2
      %s491 = smul.addr %s487, 32
      %s492 = sadd.s32 %s490, %s491
      %s493 = smul.addr %s492, 4
      %s494 = scalar_lea.vmem %s9, %s493
      %s495 = smul.u32 8, %s25
      %p496 = scmp.lt.s32.totalorder %s24, 1
      %s497 = scalar_select %p496, %s24, 1
      %p498 = scmp.lt.s32.totalorder %s495, 15
      %s499 = scalar_select %p498, %s495, 15
      %s500 = smul.addr %s499, 2
      %s501 = smul.addr %s497, 32
      %s502 = sadd.s32 %s500, %s501
      %s503 = smul.addr %s502, 8
      %s504 = scalar_lea.vmem %s0, %s503
      %s505 = smul.u32 8, %s25
      %s506 = smul.u32 %s25, 8
      %s507 = ssub.s32 %s506, 1
      %p508 = scmp.gt.s32.totalorder %s507, 0
      %s509 = scalar_select %p508, %s507, 0
      %p510 = scmp.lt.s32.totalorder %s24, 1
      %s511 = scalar_select %p510, %s24, 1
      %p512 = scmp.lt.s32.totalorder %s509, 15
      %s513 = scalar_select %p512, %s509, 15
      %s514 = smul.addr %s513, 2
      %s515 = smul.addr %s511, 32
      %s516 = sadd.s32 %s514, %s515
      %s517 = smul.addr %s516, 8
      %s518 = scalar_lea.vmem %s1, %s517
      %s519 = smul.u32 %s25, 8
      %s520 = ssub.s32 %s519, 1
      %p521 = scmp.gt.s32.totalorder %s520, 0
      %s522 = scalar_select %p521, %s520, 0
      %s523 = smul.u32 %s25, 8
      %s524 = sadd.s32 %s523, 8
      %p525 = scmp.lt.s32.totalorder %s524, 15
      %s526 = scalar_select %p525, %s524, 15
      %p527 = scmp.lt.s32.totalorder %s24, 1
      %s528 = scalar_select %p527, %s24, 1
      %p529 = scmp.lt.s32.totalorder %s526, 15
      %s530 = scalar_select %p529, %s526, 15
      %s531 = smul.addr %s530, 2
      %s532 = smul.addr %s528, 32
      %s533 = sadd.s32 %s531, %s532
      %s534 = smul.addr %s533, 8
      %s535 = scalar_lea.vmem %s2, %s534
      %s536 = smul.u32 %s25, 8
      %s537 = sadd.s32 %s536, 8
      %p538 = scmp.lt.s32.totalorder %s537, 15
      %s539 = scalar_select %p538, %s537, 15
      %s540 = smul.u32 8, %s25
      %p541 = scmp.lt.s32.totalorder %s24, 1
      %s542 = scalar_select %p541, %s24, 1
      %p543 = scmp.lt.s32.totalorder %s540, 15
      %s544 = scalar_select %p543, %s540, 15
      %s545 = smul.addr %s544, 2
      %s546 = smul.addr %s542, 32
      %s547 = sadd.s32 %s545, %s546
      %s548 = smul.addr %s547, 8
      %s549 = scalar_lea.vmem %s3, %s548
      %s550 = smul.u32 8, %s25
      %p551 = scmp.lt.s32.totalorder %s24, 1
      %s552 = scalar_select %p551, %s24, 1
      %s553 = scalar_lea.vmem %s4, %s552
      %p554 = scmp.lt.s32.totalorder %s24, 1
      %s555 = scalar_select %p554, %s24, 1
      %s556 = scalar_lea.vmem %s5, %s555
      %s557 = smul.u32 8, %s25
      %p558 = scmp.lt.s32.totalorder %s24, 1
      %s559 = scalar_select %p558, %s24, 1
      %p560 = scmp.lt.s32.totalorder %s557, 15
      %s561 = scalar_select %p560, %s557, 15
      %s562 = smul.addr %s561, 2
      %s563 = smul.addr %s559, 32
      %s564 = sadd.s32 %s562, %s563
      %s565 = smul.addr %s564, 4
      %s566 = scalar_lea.vmem %s9, %s565
      %s567 = smul.u32 8, %s25
      %v569 = vld [vmem:[%s553] sm:$0x1]
      %vm570 = vcmask 60416
      %571 = vst.msk [vmem:[#allocation2] sm:$0xf] %vm570, 0
      %572 = vst.msk [vmem:[#allocation2 + $0x10] sm:$0xf] %vm570, 0
      %573 = vst.msk [vmem:[#allocation2 + $0x20] sm:$0xf] %vm570, 0
      %574 = vst.msk [vmem:[#allocation2 + $0x30] sm:$0xf] %vm570, 0
      %575 = vst.msk [vmem:[#allocation2 + $0x40] sm:$0xf] %vm570, 0
      %576 = vst.msk [vmem:[#allocation2 + $0x50] sm:$0xf] %vm570, 0
      %577 = vst.msk [vmem:[#allocation2 + $0x60] sm:$0xf] %vm570, 0
      %578 = vst.msk [vmem:[#allocation2 + $0x70] sm:$0xf] %vm570, 0
      %579 = vst.msk [vmem:[#allocation2 + $0x80] sm:$0xf] %vm570, 0
      %580 = vst.msk [vmem:[#allocation2 + $0x90] sm:$0xf] %vm570, 0
      %581 = vst.msk [vmem:[#allocation2 + $0xc] sm:$0xf] %vm570, 0
      %582 = vst.msk [vmem:[#allocation2 + $0x1c] sm:$0xf] %vm570, 0
      %583 = vst.msk [vmem:[#allocation2 + $0x2c] sm:$0xf] %vm570, 0
      %584 = vst.msk [vmem:[#allocation2 + $0x3c] sm:$0xf] %vm570, 0
      %585 = vst.msk [vmem:[#allocation2 + $0x4c] sm:$0xf] %vm570, 0
      %586 = vst.msk [vmem:[#allocation2 + $0x5c] sm:$0xf] %vm570, 0
      %587 = vst.msk [vmem:[#allocation2 + $0x6c] sm:$0xf] %vm570, 0
      %588 = vst.msk [vmem:[#allocation2 + $0x7c] sm:$0xf] %vm570, 0
      %589 = vst.msk [vmem:[#allocation2 + $0x8c] sm:$0xf] %vm570, 0
      %590 = vst.msk [vmem:[#allocation2 + $0x9c] sm:$0xf] %vm570, 0
      %v591 = vld [vmem:[%s504] sm:$0xff]
      %v592 = vld [vmem:[%s504 + $0x8] sm:$0xff]
      %v593 = vld [vmem:[%s504 + $0x10] sm:$0xff]
      %v594 = vld [vmem:[%s504 + $0x18] sm:$0xff]
      %v595 = vld [vmem:[%s504 + $0x20] sm:$0xff]
      %v596 = vld [vmem:[%s504 + $0x28] sm:$0xff]
      %v597 = vld [vmem:[%s504 + $0x30] sm:$0xff]
      %v598 = vld [vmem:[%s504 + $0x38] sm:$0xff]
      %v599 = vld [vmem:[%s504 + $0x40] sm:$0xff]
      %v600 = vld [vmem:[%s504 + $0x48] sm:$0xff]
      %v601 = vld [vmem:[%s504 + $0x50] sm:$0xff]
      %v602 = vld [vmem:[%s504 + $0x58] sm:$0xff]
      %v603 = vld [vmem:[%s504 + $0x60] sm:$0xff]
      %v604 = vld [vmem:[%s504 + $0x68] sm:$0xff]
      %v605 = vld [vmem:[%s504 + $0x70] sm:$0xff]
      %v606 = vld [vmem:[%s504 + $0x78] sm:$0xff]
      %v608 = vlaneseq
      %v609 = vshrl.u32 %v608, 7
      %v610 = vsub.s32 0, %v609
      %v611 = vrot.slane %v569, %v610
      %v613 = vmul.f32 %v591, %v611
      %v614 = vmul.f32 %v592, %v611
      %v615 = vmul.f32 %v593, %v611
      %v616 = vmul.f32 %v594, %v611
      %v617 = vmul.f32 %v595, %v611
      %v618 = vmul.f32 %v596, %v611
      %v619 = vmul.f32 %v597, %v611
      %v620 = vmul.f32 %v598, %v611
      %v621 = vmul.f32 %v599, %v611
      %v622 = vmul.f32 %v600, %v611
      %v623 = vmul.f32 %v601, %v611
      %v624 = vmul.f32 %v602, %v611
      %v625 = vmul.f32 %v603, %v611
      %v626 = vmul.f32 %v604, %v611
      %v627 = vmul.f32 %v605, %v611
      %v628 = vmul.f32 %v606, %v611
      %v629 = vpack.c.bf16 %v614, %v613
      %v630 = vpack.c.bf16 %v616, %v615
      %v631 = vpack.c.bf16 %v618, %v617
      %v632 = vpack.c.bf16 %v620, %v619
      %v633 = vpack.c.bf16 %v622, %v621
      %v634 = vpack.c.bf16 %v624, %v623
      %v635 = vpack.c.bf16 %v626, %v625
      %v636 = vpack.c.bf16 %v628, %v627
      %v645 = vunpack.c.l.b16 %v629
      %v646 = vunpack.c.h.b16 %v629
      %v647 = vunpack.c.l.b16 %v630
      %v648 = vunpack.c.h.b16 %v630
      %v649 = vunpack.c.l.b16 %v631
      %v650 = vunpack.c.h.b16 %v631
      %v651 = vunpack.c.l.b16 %v632
      %v652 = vunpack.c.h.b16 %v632
      %v653 = vunpack.c.l.b16 %v633
      %v654 = vunpack.c.h.b16 %v633
      %v655 = vunpack.c.l.b16 %v634
      %v656 = vunpack.c.h.b16 %v634
      %v657 = vunpack.c.l.b16 %v635
      %v658 = vunpack.c.h.b16 %v635
      %v659 = vunpack.c.l.b16 %v636
      %v660 = vunpack.c.h.b16 %v636
      %v661 = vpack.c.b16 %v645, %v645
      %v662 = vpack.c.b16 %v646, %v646
      %v663 = vpack.c.b16 %v647, %v647
      %v664 = vpack.c.b16 %v648, %v648
      %v665 = vpack.c.b16 %v649, %v649
      %v666 = vpack.c.b16 %v650, %v650
      %v667 = vpack.c.b16 %v651, %v651
      %v668 = vpack.c.b16 %v652, %v652
      %v669 = vpack.c.b16 %v653, %v653
      %v670 = vpack.c.b16 %v654, %v654
      %v671 = vpack.c.b16 %v655, %v655
      %v672 = vpack.c.b16 %v656, %v656
      %v673 = vpack.c.b16 %v657, %v657
      %v674 = vpack.c.b16 %v658, %v658
      %v675 = vpack.c.b16 %v659, %v659
      %v676 = vpack.c.b16 %v660, %v660
      %s693 = scalar_lea.vmem [#allocation2], 16
      %694 = vst.msk [vmem:[%s693 + $0x4] sm:$0xf] %vm570, %v661
      %695 = vst.msk [vmem:[%s693 + $0x8] sm:$0xf] %vm570, %v662
      %696 = vst.msk [vmem:[%s693 + $0x14] sm:$0xf] %vm570, %v663
      %697 = vst.msk [vmem:[%s693 + $0x18] sm:$0xf] %vm570, %v664
      %698 = vst.msk [vmem:[%s693 + $0x24] sm:$0xf] %vm570, %v665
      %699 = vst.msk [vmem:[%s693 + $0x28] sm:$0xf] %vm570, %v666
      %700 = vst.msk [vmem:[%s693 + $0x34] sm:$0xf] %vm570, %v667
      %701 = vst.msk [vmem:[%s693 + $0x38] sm:$0xf] %vm570, %v668
      %702 = vst.msk [vmem:[%s693 + $0x44] sm:$0xf] %vm570, %v669
      %703 = vst.msk [vmem:[%s693 + $0x48] sm:$0xf] %vm570, %v670
      %704 = vst.msk [vmem:[%s693 + $0x54] sm:$0xf] %vm570, %v671
      %705 = vst.msk [vmem:[%s693 + $0x58] sm:$0xf] %vm570, %v672
      %706 = vst.msk [vmem:[%s693 + $0x64] sm:$0xf] %vm570, %v673
      %707 = vst.msk [vmem:[%s693 + $0x68] sm:$0xf] %vm570, %v674
      %708 = vst.msk [vmem:[%s693 + $0x74] sm:$0xf] %vm570, %v675
      %709 = vst.msk [vmem:[%s693 + $0x78] sm:$0xf] %vm570, %v676
      %v710 = vld [vmem:[%s518] sm:$0xff]
      %v711 = vld [vmem:[%s518 + $0x8] sm:$0xff]
      %v712 = vmul.f32 %v710, %v611
      %v713 = vmul.f32 %v711, %v611
      %v714 = vpack.c.bf16 %v713, %v712
      %v715 = vld [vmem:[%s535] sm:$0xff]
      %v716 = vld [vmem:[%s535 + $0x8] sm:$0xff]
      %v717 = vmul.f32 %v715, %v611
      %v718 = vmul.f32 %v716, %v611
      %v719 = vpack.c.bf16 %v718, %v717
      %p720 = scmp.eq.s32.totalorder %s25, 0
      %s721 = scalar_select %p720, 1, 0
      %v722 = vstv %s721
      %vm723 = vcmp.eq.s32.totalorder %v722, 1
      %v724 = vsel %vm723, 0, %v714
      %v726 = vunpack.c.l.b16 %v724
      %v727 = vunpack.c.h.b16 %v724
      %v728 = vpack.c.b16 %v726, %v726
      %v729 = vpack.c.b16 %v727, %v727
      %732 = vst.msk [vmem:[#allocation2 + $0x4] sm:$0xf] %vm570, %v728
      %733 = vst.msk [vmem:[#allocation2 + $0x8] sm:$0xf] %vm570, %v729
      %p734 = scmp.eq.s32.totalorder %s25, 1
      %s735 = scalar_select %p734, 1, 0
      %v736 = vstv %s735
      %vm737 = vcmp.eq.s32.totalorder %v736, 1
      %v738 = vsel %vm737, 0, %v719
      %v740 = vunpack.c.l.b16 %v738
      %v741 = vunpack.c.h.b16 %v738
      %v742 = vpack.c.b16 %v740, %v740
      %v743 = vpack.c.b16 %v741, %v741
      %s746 = scalar_lea.vmem [#allocation2], 144
      %747 = vst.msk [vmem:[%s746 + $0x4] sm:$0xf] %vm570, %v742
      %748 = vst.msk [vmem:[%s746 + $0x8] sm:$0xf] %vm570, %v743
      %v749 = vld [vmem:[#allocation2] sm:$0x8]
      %v750 = vld [vmem:[#allocation2 + $0x4] sm:$0xf]
      %v751 = vld [vmem:[#allocation2 + $0x8] sm:$0xf]
      %v752 = vld [vmem:[#allocation2 + $0x10] sm:$0x8]
      %v753 = vld [vmem:[#allocation2 + $0x14] sm:$0xf]
      %v754 = vld [vmem:[#allocation2 + $0x18] sm:$0xf]
      %v755 = vld [vmem:[#allocation2 + $0x20] sm:$0x8]
      %v756 = vld [vmem:[#allocation2 + $0x24] sm:$0xf]
      %v757 = vld [vmem:[#allocation2 + $0x28] sm:$0xf]
      %v758 = vld [vmem:[#allocation2 + $0x30] sm:$0x8]
      %v759 = vld [vmem:[#allocation2 + $0x34] sm:$0xf]
      %v760 = vld [vmem:[#allocation2 + $0x38] sm:$0xf]
      %v761 = vld [vmem:[#allocation2 + $0x40] sm:$0x8]
      %v762 = vld [vmem:[#allocation2 + $0x44] sm:$0xf]
      %v763 = vld [vmem:[#allocation2 + $0x48] sm:$0xf]
      %v764 = vld [vmem:[#allocation2 + $0x50] sm:$0x8]
      %v765 = vld [vmem:[#allocation2 + $0x54] sm:$0xf]
      %v766 = vld [vmem:[#allocation2 + $0x58] sm:$0xf]
      %v767 = vld [vmem:[#allocation2 + $0x60] sm:$0x8]
      %v768 = vld [vmem:[#allocation2 + $0x64] sm:$0xf]
      %v769 = vld [vmem:[#allocation2 + $0x68] sm:$0xf]
      %v770 = vld [vmem:[#allocation2 + $0x70] sm:$0x8]
      %v771 = vld [vmem:[#allocation2 + $0x74] sm:$0xf]
      %v772 = vld [vmem:[#allocation2 + $0x78] sm:$0xf]
      %v773 = vld [vmem:[#allocation2 + $0xc] sm:$0x1]
      %v774 = vld [vmem:[#allocation2 + $0x1c] sm:$0x1]
      %v775 = vld [vmem:[#allocation2 + $0x2c] sm:$0x1]
      %v776 = vld [vmem:[#allocation2 + $0x3c] sm:$0x1]
      %v777 = vld [vmem:[#allocation2 + $0x4c] sm:$0x1]
      %v778 = vld [vmem:[#allocation2 + $0x5c] sm:$0x1]
      %v779 = vld [vmem:[#allocation2 + $0x6c] sm:$0x1]
      %v780 = vld [vmem:[#allocation2 + $0x7c] sm:$0x1]
      %v805 = vunpack.c.l.b16 %v749
      %v806 = vunpack.c.l.b16 %v750
      %v807 = vunpack.c.l.b16 %v751
      %v808 = vunpack.c.l.b16 %v752
      %v809 = vunpack.c.l.b16 %v753
      %v810 = vunpack.c.l.b16 %v754
      %v811 = vunpack.c.l.b16 %v755
      %v812 = vunpack.c.l.b16 %v756
      %v813 = vunpack.c.l.b16 %v757
      %v814 = vunpack.c.l.b16 %v758
      %v815 = vunpack.c.l.b16 %v759
      %v816 = vunpack.c.l.b16 %v760
      %v817 = vunpack.c.l.b16 %v761
      %v818 = vunpack.c.l.b16 %v762
      %v819 = vunpack.c.l.b16 %v763
      %v820 = vunpack.c.l.b16 %v764
      %v821 = vunpack.c.l.b16 %v765
      %v822 = vunpack.c.l.b16 %v766
      %v823 = vunpack.c.l.b16 %v767
      %v824 = vunpack.c.l.b16 %v768
      %v825 = vunpack.c.l.b16 %v769
      %v826 = vunpack.c.l.b16 %v770
      %v827 = vunpack.c.l.b16 %v771
      %v828 = vunpack.c.l.b16 %v772
      %v829 = vpack.c.b16 %v806, %v805
      %v830 = vpack.c.b16 %v807, %v807
      %v831 = vpack.c.b16 %v809, %v808
      %v832 = vpack.c.b16 %v810, %v810
      %v833 = vpack.c.b16 %v812, %v811
      %v834 = vpack.c.b16 %v813, %v813
      %v835 = vpack.c.b16 %v815, %v814
      %v836 = vpack.c.b16 %v816, %v816
      %v837 = vpack.c.b16 %v818, %v817
      %v838 = vpack.c.b16 %v819, %v819
      %v839 = vpack.c.b16 %v821, %v820
      %v840 = vpack.c.b16 %v822, %v822
      %v841 = vpack.c.b16 %v824, %v823
      %v842 = vpack.c.b16 %v825, %v825
      %v843 = vpack.c.b16 %v827, %v826
      %v844 = vpack.c.b16 %v828, %v828
      %v845 = vpack.c.b16 %v807, %v806
      %v846 = vpack.c.b16 %v810, %v809
      %v847 = vpack.c.b16 %v813, %v812
      %v848 = vpack.c.b16 %v816, %v815
      %v849 = vpack.c.b16 %v819, %v818
      %v850 = vpack.c.b16 %v822, %v821
      %v851 = vpack.c.b16 %v825, %v824
      %v852 = vpack.c.b16 %v828, %v827
      %v854 = vshrl.u32 %v845, 16
      %v856 = vrot.slane %v854, 4
      %v857 = vshll.u32 %v845, 16
      %v859 = vrot.slane %v857, 5
      %v860 = vor.u32 %v856, %v859
      %v862 = vshrl.u32 %v846, 16
      %v864 = vrot.slane %v862, 4
      %v865 = vshll.u32 %v846, 16
      %v867 = vrot.slane %v865, 5
      %v868 = vor.u32 %v864, %v867
      %v870 = vshrl.u32 %v847, 16
      %v872 = vrot.slane %v870, 4
      %v873 = vshll.u32 %v847, 16
      %v875 = vrot.slane %v873, 5
      %v876 = vor.u32 %v872, %v875
      %v878 = vshrl.u32 %v848, 16
      %v880 = vrot.slane %v878, 4
      %v881 = vshll.u32 %v848, 16
      %v883 = vrot.slane %v881, 5
      %v884 = vor.u32 %v880, %v883
      %v886 = vshrl.u32 %v849, 16
      %v888 = vrot.slane %v886, 4
      %v889 = vshll.u32 %v849, 16
      %v891 = vrot.slane %v889, 5
      %v892 = vor.u32 %v888, %v891
      %v894 = vshrl.u32 %v850, 16
      %v896 = vrot.slane %v894, 4
      %v897 = vshll.u32 %v850, 16
      %v899 = vrot.slane %v897, 5
      %v900 = vor.u32 %v896, %v899
      %v902 = vshrl.u32 %v851, 16
      %v904 = vrot.slane %v902, 4
      %v905 = vshll.u32 %v851, 16
      %v907 = vrot.slane %v905, 5
      %v908 = vor.u32 %v904, %v907
      %v910 = vshrl.u32 %v852, 16
      %v912 = vrot.slane %v910, 4
      %v913 = vshll.u32 %v852, 16
      %v915 = vrot.slane %v913, 5
      %v916 = vor.u32 %v912, %v915
      %917 = vrot.lane.b32.xlu0 %v860, 8
      %v918 = vpop.permute.xlu0 %917
      %919 = vrot.lane.b32.xlu0 %v868, 8
      %v920 = vpop.permute.xlu0 %919
      %921 = vrot.lane.b32.xlu0 %v876, 8
      %v922 = vpop.permute.xlu0 %921
      %923 = vrot.lane.b32.xlu0 %v884, 8
      %v924 = vpop.permute.xlu0 %923
      %925 = vrot.lane.b32.xlu0 %v892, 8
      %v926 = vpop.permute.xlu0 %925
      %927 = vrot.lane.b32.xlu0 %v900, 8
      %v928 = vpop.permute.xlu0 %927
      %929 = vrot.lane.b32.xlu0 %v908, 8
      %v930 = vpop.permute.xlu0 %929
      %931 = vrot.lane.b32.xlu0 %v916, 8
      %v932 = vpop.permute.xlu0 %931
      %v941 = vunpack.c.l.b16 %v773
      %v942 = vunpack.c.l.b16 %v774
      %v943 = vunpack.c.l.b16 %v775
      %v944 = vunpack.c.l.b16 %v776
      %v945 = vunpack.c.l.b16 %v777
      %v946 = vunpack.c.l.b16 %v778
      %v947 = vunpack.c.l.b16 %v779
      %v948 = vunpack.c.l.b16 %v780
      %v949 = vpack.c.b16 %v941, %v941
      %v950 = vpack.c.b16 %v942, %v942
      %v951 = vpack.c.b16 %v943, %v943
      %v952 = vpack.c.b16 %v944, %v944
      %v953 = vpack.c.b16 %v945, %v945
      %v954 = vpack.c.b16 %v946, %v946
      %v955 = vpack.c.b16 %v947, %v947
      %v956 = vpack.c.b16 %v948, %v948
      %vm957 = vcmask 1042432
      %v958 = vrot.slane %v845, 5
      %v959 = vrot.slane %v949, 5
      %v960 = vsel %vm957, %v958, %v959
      %v961 = vrot.slane %v846, 5
      %v962 = vrot.slane %v950, 5
      %v963 = vsel %vm957, %v961, %v962
      %v964 = vrot.slane %v847, 5
      %v965 = vrot.slane %v951, 5
      %v966 = vsel %vm957, %v964, %v965
      %v967 = vrot.slane %v848, 5
      %v968 = vrot.slane %v952, 5
      %v969 = vsel %vm957, %v967, %v968
      %v970 = vrot.slane %v849, 5
      %v971 = vrot.slane %v953, 5
      %v972 = vsel %vm957, %v970, %v971
      %v973 = vrot.slane %v850, 5
      %v974 = vrot.slane %v954, 5
      %v975 = vsel %vm957, %v973, %v974
      %v976 = vrot.slane %v851, 5
      %v977 = vrot.slane %v955, 5
      %v978 = vsel %vm957, %v976, %v977
      %v979 = vrot.slane %v852, 5
      %v980 = vrot.slane %v956, 5
      %v981 = vsel %vm957, %v979, %v980
      %982 = vrot.lane.b32.xlu0 %v958, 16
      %v983 = vpop.permute.xlu0 %982
      %984 = vrot.lane.b32.xlu0 %v960, 16
      %v985 = vpop.permute.xlu0 %984
      %986 = vrot.lane.b32.xlu0 %v961, 16
      %v987 = vpop.permute.xlu0 %986
      %988 = vrot.lane.b32.xlu0 %v963, 16
      %v989 = vpop.permute.xlu0 %988
      %990 = vrot.lane.b32.xlu0 %v964, 16
      %v991 = vpop.permute.xlu0 %990
      %992 = vrot.lane.b32.xlu0 %v966, 16
      %v993 = vpop.permute.xlu0 %992
      %994 = vrot.lane.b32.xlu0 %v967, 16
      %v995 = vpop.permute.xlu0 %994
      %996 = vrot.lane.b32.xlu0 %v969, 16
      %v997 = vpop.permute.xlu0 %996
      %998 = vrot.lane.b32.xlu0 %v970, 16
      %v999 = vpop.permute.xlu0 %998
      %1000 = vrot.lane.b32.xlu0 %v972, 16
      %v1001 = vpop.permute.xlu0 %1000
      %1002 = vrot.lane.b32.xlu0 %v973, 16
      %v1003 = vpop.permute.xlu0 %1002
      %1004 = vrot.lane.b32.xlu0 %v975, 16
      %v1005 = vpop.permute.xlu0 %1004
      %1006 = vrot.lane.b32.xlu0 %v976, 16
      %v1007 = vpop.permute.xlu0 %1006
      %1008 = vrot.lane.b32.xlu0 %v978, 16
      %v1009 = vpop.permute.xlu0 %1008
      %1010 = vrot.lane.b32.xlu0 %v979, 16
      %v1011 = vpop.permute.xlu0 %1010
      %1012 = vrot.lane.b32.xlu0 %v981, 16
      %v1013 = vpop.permute.xlu0 %1012
      %vm1014 = vcmask 64512
      %v1017 = vsel %vm1014, %v829, %v918
      %v1019 = vsel %vm1014, %v830, %v918
      %v1022 = vsel %vm1014, %v831, %v920
      %v1024 = vsel %vm1014, %v832, %v920
      %v1027 = vsel %vm1014, %v833, %v922
      %v1029 = vsel %vm1014, %v834, %v922
      %v1032 = vsel %vm1014, %v835, %v924
      %v1034 = vsel %vm1014, %v836, %v924
      %v1037 = vsel %vm1014, %v837, %v926
      %v1039 = vsel %vm1014, %v838, %v926
      %v1042 = vsel %vm1014, %v839, %v928
      %v1044 = vsel %vm1014, %v840, %v928
      %v1047 = vsel %vm1014, %v841, %v930
      %v1049 = vsel %vm1014, %v842, %v930
      %v1052 = vsel %vm1014, %v843, %v932
      %v1054 = vsel %vm1014, %v844, %v932
      %vm1055 = vcmask 130048
      %v1057 = vsel %vm1055, %v1017, %v983
      %v1059 = vsel %vm1055, %v1019, %v985
      %v1061 = vsel %vm1055, %v1022, %v987
      %v1063 = vsel %vm1055, %v1024, %v989
      %v1065 = vsel %vm1055, %v1027, %v991
      %v1067 = vsel %vm1055, %v1029, %v993
      %v1069 = vsel %vm1055, %v1032, %v995
      %v1071 = vsel %vm1055, %v1034, %v997
      %v1073 = vsel %vm1055, %v1037, %v999
      %v1075 = vsel %vm1055, %v1039, %v1001
      %v1077 = vsel %vm1055, %v1042, %v1003
      %v1079 = vsel %vm1055, %v1044, %v1005
      %v1081 = vsel %vm1055, %v1047, %v1007
      %v1083 = vsel %vm1055, %v1049, %v1009
      %v1085 = vsel %vm1055, %v1052, %v1011
      %v1087 = vsel %vm1055, %v1054, %v1013
      %vm1088 = vsmask.f32 4352
      %v1089 = vshrl.u32 %v1057, 16
      %v1091 = vrot.slane %v1089, 3
      %v1092 = vshll.u32 %v1057, 16
      %v1094 = vrot.slane %v1092, 4
      %v1095 = vor.u32 %v1091, %v1094
      %v1096 = vshrl.u32 %v1059, 16
      %v1098 = vrot.slane %v1096, 3
      %v1099 = vshll.u32 %v1059, 16
      %v1101 = vrot.slane %v1099, 4
      %v1102 = vor.u32 %v1098, %v1101
      %v1103 = vsel %vm1088, %v1095, %v1102
      %v1104 = vshrl.u32 %v1061, 16
      %v1106 = vrot.slane %v1104, 3
      %v1107 = vshll.u32 %v1061, 16
      %v1109 = vrot.slane %v1107, 4
      %v1110 = vor.u32 %v1106, %v1109
      %v1111 = vshrl.u32 %v1063, 16
      %v1113 = vrot.slane %v1111, 3
      %v1114 = vshll.u32 %v1063, 16
      %v1116 = vrot.slane %v1114, 4
      %v1117 = vor.u32 %v1113, %v1116
      %v1118 = vsel %vm1088, %v1110, %v1117
      %v1119 = vshrl.u32 %v1065, 16
      %v1121 = vrot.slane %v1119, 3
      %v1122 = vshll.u32 %v1065, 16
      %v1124 = vrot.slane %v1122, 4
      %v1125 = vor.u32 %v1121, %v1124
      %v1126 = vshrl.u32 %v1067, 16
      %v1128 = vrot.slane %v1126, 3
      %v1129 = vshll.u32 %v1067, 16
      %v1131 = vrot.slane %v1129, 4
      %v1132 = vor.u32 %v1128, %v1131
      %v1133 = vsel %vm1088, %v1125, %v1132
      %v1134 = vshrl.u32 %v1069, 16
      %v1136 = vrot.slane %v1134, 3
      %v1137 = vshll.u32 %v1069, 16
      %v1139 = vrot.slane %v1137, 4
      %v1140 = vor.u32 %v1136, %v1139
      %v1141 = vshrl.u32 %v1071, 16
      %v1143 = vrot.slane %v1141, 3
      %v1144 = vshll.u32 %v1071, 16
      %v1146 = vrot.slane %v1144, 4
      %v1147 = vor.u32 %v1143, %v1146
      %v1148 = vsel %vm1088, %v1140, %v1147
      %v1149 = vshrl.u32 %v1073, 16
      %v1151 = vrot.slane %v1149, 3
      %v1152 = vshll.u32 %v1073, 16
      %v1154 = vrot.slane %v1152, 4
      %v1155 = vor.u32 %v1151, %v1154
      %v1156 = vshrl.u32 %v1075, 16
      %v1158 = vrot.slane %v1156, 3
      %v1159 = vshll.u32 %v1075, 16
      %v1161 = vrot.slane %v1159, 4
      %v1162 = vor.u32 %v1158, %v1161
      %v1163 = vsel %vm1088, %v1155, %v1162
      %v1164 = vshrl.u32 %v1077, 16
      %v1166 = vrot.slane %v1164, 3
      %v1167 = vshll.u32 %v1077, 16
      %v1169 = vrot.slane %v1167, 4
      %v1170 = vor.u32 %v1166, %v1169
      %v1171 = vshrl.u32 %v1079, 16
      %v1173 = vrot.slane %v1171, 3
      %v1174 = vshll.u32 %v1079, 16
      %v1176 = vrot.slane %v1174, 4
      %v1177 = vor.u32 %v1173, %v1176
      %v1178 = vsel %vm1088, %v1170, %v1177
      %v1179 = vshrl.u32 %v1081, 16
      %v1181 = vrot.slane %v1179, 3
      %v1182 = vshll.u32 %v1081, 16
      %v1184 = vrot.slane %v1182, 4
      %v1185 = vor.u32 %v1181, %v1184
      %v1186 = vshrl.u32 %v1083, 16
      %v1188 = vrot.slane %v1186, 3
      %v1189 = vshll.u32 %v1083, 16
      %v1191 = vrot.slane %v1189, 4
      %v1192 = vor.u32 %v1188, %v1191
      %v1193 = vsel %vm1088, %v1185, %v1192
      %v1194 = vshrl.u32 %v1085, 16
      %v1196 = vrot.slane %v1194, 3
      %v1197 = vshll.u32 %v1085, 16
      %v1199 = vrot.slane %v1197, 4
      %v1200 = vor.u32 %v1196, %v1199
      %v1201 = vshrl.u32 %v1087, 16
      %v1203 = vrot.slane %v1201, 3
      %v1204 = vshll.u32 %v1087, 16
      %v1206 = vrot.slane %v1204, 4
      %v1207 = vor.u32 %v1203, %v1206
      %v1208 = vsel %vm1088, %v1200, %v1207
      %v1209 = vld [vmem:[%s6] sm:$0xf]
      %v1210 = vld [vmem:[%s6 + $0x4] sm:$0xf]
      %v1211 = vld [vmem:[%s6 + $0x8] sm:$0xf]
      %v1212 = vld [vmem:[%s693] sm:$0x8]
      %v1213 = vld [vmem:[%s693 + $0x4] sm:$0xf]
      %v1214 = vld [vmem:[%s693 + $0x8] sm:$0xf]
      %v1215 = vld [vmem:[%s693 + $0x10] sm:$0x8]
      %v1216 = vld [vmem:[%s693 + $0x14] sm:$0xf]
      %v1217 = vld [vmem:[%s693 + $0x18] sm:$0xf]
      %v1218 = vld [vmem:[%s693 + $0x20] sm:$0x8]
      %v1219 = vld [vmem:[%s693 + $0x24] sm:$0xf]
      %v1220 = vld [vmem:[%s693 + $0x28] sm:$0xf]
      %v1221 = vld [vmem:[%s693 + $0x30] sm:$0x8]
      %v1222 = vld [vmem:[%s693 + $0x34] sm:$0xf]
      %v1223 = vld [vmem:[%s693 + $0x38] sm:$0xf]
      %v1224 = vld [vmem:[%s693 + $0x40] sm:$0x8]
      %v1225 = vld [vmem:[%s693 + $0x44] sm:$0xf]
      %v1226 = vld [vmem:[%s693 + $0x48] sm:$0xf]
      %v1227 = vld [vmem:[%s693 + $0x50] sm:$0x8]
      %v1228 = vld [vmem:[%s693 + $0x54] sm:$0xf]
      %v1229 = vld [vmem:[%s693 + $0x58] sm:$0xf]
      %v1230 = vld [vmem:[%s693 + $0x60] sm:$0x8]
      %v1231 = vld [vmem:[%s693 + $0x64] sm:$0xf]
      %v1232 = vld [vmem:[%s693 + $0x68] sm:$0xf]
      %v1233 = vld [vmem:[%s693 + $0x70] sm:$0x8]
      %v1234 = vld [vmem:[%s693 + $0x74] sm:$0xf]
      %v1235 = vld [vmem:[%s693 + $0x78] sm:$0xf]
      %v1236 = vld [vmem:[%s693 + $0xc] sm:$0x1]
      %v1237 = vld [vmem:[%s693 + $0x1c] sm:$0x1]
      %v1238 = vld [vmem:[%s693 + $0x2c] sm:$0x1]
      %v1239 = vld [vmem:[%s693 + $0x3c] sm:$0x1]
      %v1240 = vld [vmem:[%s693 + $0x4c] sm:$0x1]
      %v1241 = vld [vmem:[%s693 + $0x5c] sm:$0x1]
      %v1242 = vld [vmem:[%s693 + $0x6c] sm:$0x1]
      %v1243 = vld [vmem:[%s693 + $0x7c] sm:$0x1]
      %v1268 = vunpack.c.l.b16 %v1212
      %v1269 = vunpack.c.l.b16 %v1213
      %v1270 = vunpack.c.l.b16 %v1214
      %v1271 = vunpack.c.l.b16 %v1215
      %v1272 = vunpack.c.l.b16 %v1216
      %v1273 = vunpack.c.l.b16 %v1217
      %v1274 = vunpack.c.l.b16 %v1218
      %v1275 = vunpack.c.l.b16 %v1219
      %v1276 = vunpack.c.l.b16 %v1220
      %v1277 = vunpack.c.l.b16 %v1221
      %v1278 = vunpack.c.l.b16 %v1222
      %v1279 = vunpack.c.l.b16 %v1223
      %v1280 = vunpack.c.l.b16 %v1224
      %v1281 = vunpack.c.l.b16 %v1225
      %v1282 = vunpack.c.l.b16 %v1226
      %v1283 = vunpack.c.l.b16 %v1227
      %v1284 = vunpack.c.l.b16 %v1228
      %v1285 = vunpack.c.l.b16 %v1229
      %v1286 = vunpack.c.l.b16 %v1230
      %v1287 = vunpack.c.l.b16 %v1231
      %v1288 = vunpack.c.l.b16 %v1232
      %v1289 = vunpack.c.l.b16 %v1233
      %v1290 = vunpack.c.l.b16 %v1234
      %v1291 = vunpack.c.l.b16 %v1235
      %v1292 = vpack.c.b16 %v1269, %v1268
      %v1293 = vpack.c.b16 %v1270, %v1270
      %v1294 = vpack.c.b16 %v1272, %v1271
      %v1295 = vpack.c.b16 %v1273, %v1273
      %v1296 = vpack.c.b16 %v1275, %v1274
      %v1297 = vpack.c.b16 %v1276, %v1276
      %v1298 = vpack.c.b16 %v1278, %v1277
      %v1299 = vpack.c.b16 %v1279, %v1279
      %v1300 = vpack.c.b16 %v1281, %v1280
      %v1301 = vpack.c.b16 %v1282, %v1282
      %v1302 = vpack.c.b16 %v1284, %v1283
      %v1303 = vpack.c.b16 %v1285, %v1285
      %v1304 = vpack.c.b16 %v1287, %v1286
      %v1305 = vpack.c.b16 %v1288, %v1288
      %v1306 = vpack.c.b16 %v1290, %v1289
      %v1307 = vpack.c.b16 %v1291, %v1291
      %v1308 = vpack.c.b16 %v1270, %v1269
      %v1309 = vpack.c.b16 %v1273, %v1272
      %v1310 = vpack.c.b16 %v1276, %v1275
      %v1311 = vpack.c.b16 %v1279, %v1278
      %v1312 = vpack.c.b16 %v1282, %v1281
      %v1313 = vpack.c.b16 %v1285, %v1284
      %v1314 = vpack.c.b16 %v1288, %v1287
      %v1315 = vpack.c.b16 %v1291, %v1290
      %v1317 = vshrl.u32 %v1308, 16
      %v1319 = vrot.slane %v1317, 4
      %v1320 = vshll.u32 %v1308, 16
      %v1322 = vrot.slane %v1320, 5
      %v1323 = vor.u32 %v1319, %v1322
      %v1325 = vshrl.u32 %v1309, 16
      %v1327 = vrot.slane %v1325, 4
      %v1328 = vshll.u32 %v1309, 16
      %v1330 = vrot.slane %v1328, 5
      %v1331 = vor.u32 %v1327, %v1330
      %v1333 = vshrl.u32 %v1310, 16
      %v1335 = vrot.slane %v1333, 4
      %v1336 = vshll.u32 %v1310, 16
      %v1338 = vrot.slane %v1336, 5
      %v1339 = vor.u32 %v1335, %v1338
      %v1341 = vshrl.u32 %v1311, 16
      %v1343 = vrot.slane %v1341, 4
      %v1344 = vshll.u32 %v1311, 16
      %v1346 = vrot.slane %v1344, 5
      %v1347 = vor.u32 %v1343, %v1346
      %v1349 = vshrl.u32 %v1312, 16
      %v1351 = vrot.slane %v1349, 4
      %v1352 = vshll.u32 %v1312, 16
      %v1354 = vrot.slane %v1352, 5
      %v1355 = vor.u32 %v1351, %v1354
      %v1357 = vshrl.u32 %v1313, 16
      %v1359 = vrot.slane %v1357, 4
      %v1360 = vshll.u32 %v1313, 16
      %v1362 = vrot.slane %v1360, 5
      %v1363 = vor.u32 %v1359, %v1362
      %v1365 = vshrl.u32 %v1314, 16
      %v1367 = vrot.slane %v1365, 4
      %v1368 = vshll.u32 %v1314, 16
      %v1370 = vrot.slane %v1368, 5
      %v1371 = vor.u32 %v1367, %v1370
      %v1373 = vshrl.u32 %v1315, 16
      %v1375 = vrot.slane %v1373, 4
      %v1376 = vshll.u32 %v1315, 16
      %v1378 = vrot.slane %v1376, 5
      %v1379 = vor.u32 %v1375, %v1378
      %1380 = vrot.lane.b32.xlu0 %v1323, 8
      %v1381 = vpop.permute.xlu0 %1380
      %1382 = vrot.lane.b32.xlu0 %v1331, 8
      %v1383 = vpop.permute.xlu0 %1382
      %1384 = vrot.lane.b32.xlu0 %v1339, 8
      %v1385 = vpop.permute.xlu0 %1384
      %1386 = vrot.lane.b32.xlu0 %v1347, 8
      %v1387 = vpop.permute.xlu0 %1386
      %1388 = vrot.lane.b32.xlu0 %v1355, 8
      %v1389 = vpop.permute.xlu0 %1388
      %1390 = vrot.lane.b32.xlu0 %v1363, 8
      %v1391 = vpop.permute.xlu0 %1390
      %1392 = vrot.lane.b32.xlu0 %v1371, 8
      %v1393 = vpop.permute.xlu0 %1392
      %1394 = vrot.lane.b32.xlu0 %v1379, 8
      %v1395 = vpop.permute.xlu0 %1394
      %v1404 = vunpack.c.l.b16 %v1236
      %v1405 = vunpack.c.l.b16 %v1237
      %v1406 = vunpack.c.l.b16 %v1238
      %v1407 = vunpack.c.l.b16 %v1239
      %v1408 = vunpack.c.l.b16 %v1240
      %v1409 = vunpack.c.l.b16 %v1241
      %v1410 = vunpack.c.l.b16 %v1242
      %v1411 = vunpack.c.l.b16 %v1243
      %v1412 = vpack.c.b16 %v1404, %v1404
      %v1413 = vpack.c.b16 %v1405, %v1405
      %v1414 = vpack.c.b16 %v1406, %v1406
      %v1415 = vpack.c.b16 %v1407, %v1407
      %v1416 = vpack.c.b16 %v1408, %v1408
      %v1417 = vpack.c.b16 %v1409, %v1409
      %v1418 = vpack.c.b16 %v1410, %v1410
      %v1419 = vpack.c.b16 %v1411, %v1411
      %v1420 = vrot.slane %v1308, 5
      %v1421 = vrot.slane %v1412, 5
      %v1422 = vsel %vm957, %v1420, %v1421
      %v1423 = vrot.slane %v1309, 5
      %v1424 = vrot.slane %v1413, 5
      %v1425 = vsel %vm957, %v1423, %v1424
      %v1426 = vrot.slane %v1310, 5
      %v1427 = vrot.slane %v1414, 5
      %v1428 = vsel %vm957, %v1426, %v1427
      %v1429 = vrot.slane %v1311, 5
      %v1430 = vrot.slane %v1415, 5
      %v1431 = vsel %vm957, %v1429, %v1430
      %v1432 = vrot.slane %v1312, 5
      %v1433 = vrot.slane %v1416, 5
      %v1434 = vsel %vm957, %v1432, %v1433
      %v1435 = vrot.slane %v1313, 5
      %v1436 = vrot.slane %v1417, 5
      %v1437 = vsel %vm957, %v1435, %v1436
      %v1438 = vrot.slane %v1314, 5
      %v1439 = vrot.slane %v1418, 5
      %v1440 = vsel %vm957, %v1438, %v1439
      %v1441 = vrot.slane %v1315, 5
      %v1442 = vrot.slane %v1419, 5
      %v1443 = vsel %vm957, %v1441, %v1442
      %1444 = vrot.lane.b32.xlu0 %v1420, 16
      %v1445 = vpop.permute.xlu0 %1444
      %1446 = vrot.lane.b32.xlu0 %v1422, 16
      %v1447 = vpop.permute.xlu0 %1446
      %1448 = vrot.lane.b32.xlu0 %v1423, 16
      %v1449 = vpop.permute.xlu0 %1448
      %1450 = vrot.lane.b32.xlu0 %v1425, 16
      %v1451 = vpop.permute.xlu0 %1450
      %1452 = vrot.lane.b32.xlu0 %v1426, 16
      %v1453 = vpop.permute.xlu0 %1452
      %1454 = vrot.lane.b32.xlu0 %v1428, 16
      %v1455 = vpop.permute.xlu0 %1454
      %1456 = vrot.lane.b32.xlu0 %v1429, 16
      %v1457 = vpop.permute.xlu0 %1456
      %1458 = vrot.lane.b32.xlu0 %v1431, 16
      %v1459 = vpop.permute.xlu0 %1458
      %1460 = vrot.lane.b32.xlu0 %v1432, 16
      %v1461 = vpop.permute.xlu0 %1460
      %1462 = vrot.lane.b32.xlu0 %v1434, 16
      %v1463 = vpop.permute.xlu0 %1462
      %1464 = vrot.lane.b32.xlu0 %v1435, 16
      %v1465 = vpop.permute.xlu0 %1464
      %1466 = vrot.lane.b32.xlu0 %v1437, 16
      %v1467 = vpop.permute.xlu0 %1466
      %1468 = vrot.lane.b32.xlu0 %v1438, 16
      %v1469 = vpop.permute.xlu0 %1468
      %1470 = vrot.lane.b32.xlu0 %v1440, 16
      %v1471 = vpop.permute.xlu0 %1470
      %1472 = vrot.lane.b32.xlu0 %v1441, 16
      %v1473 = vpop.permute.xlu0 %1472
      %1474 = vrot.lane.b32.xlu0 %v1443, 16
      %v1475 = vpop.permute.xlu0 %1474
      %v1478 = vsel %vm1014, %v1292, %v1381
      %v1480 = vsel %vm1014, %v1293, %v1381
      %v1483 = vsel %vm1014, %v1294, %v1383
      %v1485 = vsel %vm1014, %v1295, %v1383
      %v1488 = vsel %vm1014, %v1296, %v1385
      %v1490 = vsel %vm1014, %v1297, %v1385
      %v1493 = vsel %vm1014, %v1298, %v1387
      %v1495 = vsel %vm1014, %v1299, %v1387
      %v1498 = vsel %vm1014, %v1300, %v1389
      %v1500 = vsel %vm1014, %v1301, %v1389
      %v1503 = vsel %vm1014, %v1302, %v1391
      %v1505 = vsel %vm1014, %v1303, %v1391
      %v1508 = vsel %vm1014, %v1304, %v1393
      %v1510 = vsel %vm1014, %v1305, %v1393
      %v1513 = vsel %vm1014, %v1306, %v1395
      %v1515 = vsel %vm1014, %v1307, %v1395
      %v1517 = vsel %vm1055, %v1478, %v1445
      %v1519 = vsel %vm1055, %v1480, %v1447
      %v1521 = vsel %vm1055, %v1483, %v1449
      %v1523 = vsel %vm1055, %v1485, %v1451
      %v1525 = vsel %vm1055, %v1488, %v1453
      %v1527 = vsel %vm1055, %v1490, %v1455
      %v1529 = vsel %vm1055, %v1493, %v1457
      %v1531 = vsel %vm1055, %v1495, %v1459
      %v1533 = vsel %vm1055, %v1498, %v1461
      %v1535 = vsel %vm1055, %v1500, %v1463
      %v1537 = vsel %vm1055, %v1503, %v1465
      %v1539 = vsel %vm1055, %v1505, %v1467
      %v1541 = vsel %vm1055, %v1508, %v1469
      %v1543 = vsel %vm1055, %v1510, %v1471
      %v1545 = vsel %vm1055, %v1513, %v1473
      %v1547 = vsel %vm1055, %v1515, %v1475
      %v1548 = vshrl.u32 %v1517, 16
      %v1550 = vrot.slane %v1548, 3
      %v1551 = vshll.u32 %v1517, 16
      %v1553 = vrot.slane %v1551, 4
      %v1554 = vor.u32 %v1550, %v1553
      %v1555 = vshrl.u32 %v1519, 16
      %v1557 = vrot.slane %v1555, 3
      %v1558 = vshll.u32 %v1519, 16
      %v1560 = vrot.slane %v1558, 4
      %v1561 = vor.u32 %v1557, %v1560
      %v1562 = vsel %vm1088, %v1554, %v1561
      %v1563 = vshrl.u32 %v1521, 16
      %v1565 = vrot.slane %v1563, 3
      %v1566 = vshll.u32 %v1521, 16
      %v1568 = vrot.slane %v1566, 4
      %v1569 = vor.u32 %v1565, %v1568
      %v1570 = vshrl.u32 %v1523, 16
      %v1572 = vrot.slane %v1570, 3
      %v1573 = vshll.u32 %v1523, 16
      %v1575 = vrot.slane %v1573, 4
      %v1576 = vor.u32 %v1572, %v1575
      %v1577 = vsel %vm1088, %v1569, %v1576
      %v1578 = vshrl.u32 %v1525, 16
      %v1580 = vrot.slane %v1578, 3
      %v1581 = vshll.u32 %v1525, 16
      %v1583 = vrot.slane %v1581, 4
      %v1584 = vor.u32 %v1580, %v1583
      %v1585 = vshrl.u32 %v1527, 16
      %v1587 = vrot.slane %v1585, 3
      %v1588 = vshll.u32 %v1527, 16
      %v1590 = vrot.slane %v1588, 4
      %v1591 = vor.u32 %v1587, %v1590
      %v1592 = vsel %vm1088, %v1584, %v1591
      %v1593 = vshrl.u32 %v1529, 16
      %v1595 = vrot.slane %v1593, 3
      %v1596 = vshll.u32 %v1529, 16
      %v1598 = vrot.slane %v1596, 4
      %v1599 = vor.u32 %v1595, %v1598
      %v1600 = vshrl.u32 %v1531, 16
      %v1602 = vrot.slane %v1600, 3
      %v1603 = vshll.u32 %v1531, 16
      %v1605 = vrot.slane %v1603, 4
      %v1606 = vor.u32 %v1602, %v1605
      %v1607 = vsel %vm1088, %v1599, %v1606
      %v1608 = vshrl.u32 %v1533, 16
      %v1610 = vrot.slane %v1608, 3
      %v1611 = vshll.u32 %v1533, 16
      %v1613 = vrot.slane %v1611, 4
      %v1614 = vor.u32 %v1610, %v1613
      %v1615 = vshrl.u32 %v1535, 16
      %v1617 = vrot.slane %v1615, 3
      %v1618 = vshll.u32 %v1535, 16
      %v1620 = vrot.slane %v1618, 4
      %v1621 = vor.u32 %v1617, %v1620
      %v1622 = vsel %vm1088, %v1614, %v1621
      %v1623 = vshrl.u32 %v1537, 16
      %v1625 = vrot.slane %v1623, 3
      %v1626 = vshll.u32 %v1537, 16
      %v1628 = vrot.slane %v1626, 4
      %v1629 = vor.u32 %v1625, %v1628
      %v1630 = vshrl.u32 %v1539, 16
      %v1632 = vrot.slane %v1630, 3
      %v1633 = vshll.u32 %v1539, 16
      %v1635 = vrot.slane %v1633, 4
      %v1636 = vor.u32 %v1632, %v1635
      %v1637 = vsel %vm1088, %v1629, %v1636
      %v1638 = vshrl.u32 %v1541, 16
      %v1640 = vrot.slane %v1638, 3
      %v1641 = vshll.u32 %v1541, 16
      %v1643 = vrot.slane %v1641, 4
      %v1644 = vor.u32 %v1640, %v1643
      %v1645 = vshrl.u32 %v1543, 16
      %v1647 = vrot.slane %v1645, 3
      %v1648 = vshll.u32 %v1543, 16
      %v1650 = vrot.slane %v1648, 4
      %v1651 = vor.u32 %v1647, %v1650
      %v1652 = vsel %vm1088, %v1644, %v1651
      %v1653 = vshrl.u32 %v1545, 16
      %v1655 = vrot.slane %v1653, 3
      %v1656 = vshll.u32 %v1545, 16
      %v1658 = vrot.slane %v1656, 4
      %v1659 = vor.u32 %v1655, %v1658
      %v1660 = vshrl.u32 %v1547, 16
      %v1662 = vrot.slane %v1660, 3
      %v1663 = vshll.u32 %v1547, 16
      %v1665 = vrot.slane %v1663, 4
      %v1666 = vor.u32 %v1662, %v1665
      %v1667 = vsel %vm1088, %v1659, %v1666
      %s1668 = scalar_lea.vmem %s6, 12
      %v1669 = vld [vmem:[%s1668] sm:$0xf]
      %v1670 = vld [vmem:[%s1668 + $0x4] sm:$0xf]
      %v1671 = vld [vmem:[%s1668 + $0x8] sm:$0xf]
      %v1675 = vunpack.c.l.b16 %v1669
      %v1676 = vunpack.c.l.b16 %v1670
      %v1677 = vunpack.c.l.b16 %v1671
      %v1678 = vpack.c.b16 %v1676, %v1675
      %v1679 = vpack.c.b16 %v1677, %v1677
      %vm1681 = vcmask 195584
      %v1683 = vsel %vm1681, %v1562, 0
      %v1686 = vsel %vm1681, %v1577, 0
      %v1689 = vsel %vm1681, %v1592, 0
      %v1692 = vsel %vm1681, %v1607, 0
      %v1695 = vsel %vm1681, %v1622, 0
      %v1698 = vsel %vm1681, %v1637, 0
      %v1701 = vsel %vm1681, %v1652, 0
      %v1704 = vsel %vm1681, %v1667, 0
      %vm1706 = vcmask 1043456
      %v1708 = vsel %vm1706, %v1679, 0
      %1710 = vmatprep.subr.bf16.mxu0 0
      %1711 = vmatpush1.bf16.msra.mxu0 0
      %1712 = vmatprep.subr.bf16.mxu0 0
      %1713 = vmatpush1.bf16.msra.mxu0 0
      %1714 = vmatprep.subr.bf16.mxu0 0
      %1715 = vmatpush1.bf16.msra.mxu0 0
      %1716 = vmatprep.subr.bf16.mxu0 0
      %1717 = vmatpush1.bf16.msra.mxu0 0
      %1718 = vmatprep.subr.bf16.mxu0 0
      %1719 = vmatpush1.bf16.msra.mxu0 0
      %1720 = vmatprep.subr.bf16.mxu0 0
      %1721 = vmatpush1.bf16.msra.mxu0 0
      %1722 = vmatprep.subr.bf16.mxu0 0
      %1723 = vmatpush1.bf16.msra.mxu0 %v1708
      %1724 = vmatprep.subr.bf16.mxu0 0
      %1725 = vmatpush1.bf16.msra.mxu0 %v1678
      %1726 = vmatprep.subr.bf16.mxu0 0
      %1727 = vmatpush2.bf16.msra.mxu0 0
      %1728 = vmatprep.subr.bf16.mxu0 0
      %1729 = vmatpush2.bf16.msra.mxu0 0
      %1730 = vmatprep.subr.bf16.mxu0 0
      %1731 = vmatpush2.bf16.msra.mxu0 0
      %1732 = vmatprep.subr.bf16.mxu0 0
      %1733 = vmatpush2.bf16.msra.mxu0 0
      %1734 = vmatprep.subr.bf16.mxu0 0
      %1735 = vmatpush2.bf16.msra.mxu0 0
      %1736 = vmatprep.subr.bf16.mxu0 0
      %1737 = vmatpush2.bf16.msra.mxu0 0
      %1738 = vmatprep.subr.bf16.mxu0 0
      %1739 = vmatpush2.bf16.msra.mxu0 0
      %1740 = vmatprep.subr.bf16.mxu0 0
      %1741 = vmatpush2.bf16.msra.mxu0 0
      %1742 = vmatprep.mubr.bf16.mxu0 0
      %1743 = vmatmul.mubr.bf16.gmra.mxu0 %v1683
      %v1744 = vpop.f32.mrf.mxu0
      %v1745 = vadd.f32 0.0, %v1744
      %v1746 = vpop.f32.mrf.mxu0
      %v1747 = vpop.f32.mrf.mxu0
      %v1748 = vadd.f32 0.0, %v1747
      %v1749 = vpop.f32.mrf.mxu0
      %1750 = vmatprep.mubr.bf16.mxu0 0
      %1751 = vmatmul.mubr.bf16.gmra.mxu0 %v1686
      %v1752 = vpop.f32.mrf.mxu0
      %v1753 = vadd.f32 0.0, %v1752
      %v1754 = vpop.f32.mrf.mxu0
      %v1755 = vpop.f32.mrf.mxu0
      %v1756 = vadd.f32 0.0, %v1755
      %v1757 = vpop.f32.mrf.mxu0
      %1758 = vmatprep.mubr.bf16.mxu0 0
      %1759 = vmatmul.mubr.bf16.gmra.mxu0 %v1689
      %v1760 = vpop.f32.mrf.mxu0
      %v1761 = vadd.f32 0.0, %v1760
      %v1762 = vpop.f32.mrf.mxu0
      %v1763 = vpop.f32.mrf.mxu0
      %v1764 = vadd.f32 0.0, %v1763
      %v1765 = vpop.f32.mrf.mxu0
      %1766 = vmatprep.mubr.bf16.mxu0 0
      %1767 = vmatmul.mubr.bf16.gmra.mxu0 %v1692
      %v1768 = vpop.f32.mrf.mxu0
      %v1769 = vadd.f32 0.0, %v1768
      %v1770 = vpop.f32.mrf.mxu0
      %v1771 = vpop.f32.mrf.mxu0
      %v1772 = vadd.f32 0.0, %v1771
      %v1773 = vpop.f32.mrf.mxu0
      %1774 = vmatprep.mubr.bf16.mxu0 0
      %1775 = vmatmul.mubr.bf16.gmra.mxu0 %v1695
      %v1776 = vpop.f32.mrf.mxu0
      %v1777 = vadd.f32 0.0, %v1776
      %v1778 = vpop.f32.mrf.mxu0
      %v1779 = vpop.f32.mrf.mxu0
      %v1780 = vadd.f32 0.0, %v1779
      %v1781 = vpop.f32.mrf.mxu0
      %1782 = vmatprep.mubr.bf16.mxu0 0
      %1783 = vmatmul.mubr.bf16.gmra.mxu0 %v1698
      %v1784 = vpop.f32.mrf.mxu0
      %v1785 = vadd.f32 0.0, %v1784
      %v1786 = vpop.f32.mrf.mxu0
      %v1787 = vpop.f32.mrf.mxu0
      %v1788 = vadd.f32 0.0, %v1787
      %v1789 = vpop.f32.mrf.mxu0
      %1790 = vmatprep.mubr.bf16.mxu0 0
      %1791 = vmatmul.mubr.bf16.gmra.mxu0 %v1701
      %v1792 = vpop.f32.mrf.mxu0
      %v1793 = vadd.f32 0.0, %v1792
      %v1794 = vpop.f32.mrf.mxu0
      %v1795 = vpop.f32.mrf.mxu0
      %v1796 = vadd.f32 0.0, %v1795
      %v1797 = vpop.f32.mrf.mxu0
      %1798 = vmatprep.mubr.bf16.mxu0 0
      %1799 = vmatmul.mubr.bf16.gmra.mxu0 %v1704
      %v1800 = vpop.f32.mrf.mxu0
      %v1801 = vadd.f32 0.0, %v1800
      %v1802 = vpop.f32.mrf.mxu0
      %v1803 = vpop.f32.mrf.mxu0
      %v1804 = vadd.f32 0.0, %v1803
      %v1805 = vpop.f32.mrf.mxu0
      %1806 = vdwg.mxu0
      %v1810 = vunpack.c.l.b16 %v1209
      %v1811 = vunpack.c.l.b16 %v1210
      %v1812 = vunpack.c.l.b16 %v1211
      %v1813 = vpack.c.b16 %v1811, %v1810
      %v1814 = vpack.c.b16 %v1812, %v1812
      %v1817 = vsel %vm1681, %v1103, 0
      %v1820 = vsel %vm1681, %v1118, 0
      %v1823 = vsel %vm1681, %v1133, 0
      %v1826 = vsel %vm1681, %v1148, 0
      %v1829 = vsel %vm1681, %v1163, 0
      %v1832 = vsel %vm1681, %v1178, 0
      %v1835 = vsel %vm1681, %v1193, 0
      %v1838 = vsel %vm1681, %v1208, 0
      %v1841 = vsel %vm1706, %v1814, 0
      %1843 = vmatprep.subr.bf16.mxu0 0
      %1844 = vmatpush1.bf16.msra.mxu0 0
      %1845 = vmatprep.subr.bf16.mxu0 0
      %1846 = vmatpush1.bf16.msra.mxu0 0
      %1847 = vmatprep.subr.bf16.mxu0 0
      %1848 = vmatpush1.bf16.msra.mxu0 0
      %1849 = vmatprep.subr.bf16.mxu0 0
      %1850 = vmatpush1.bf16.msra.mxu0 0
      %1851 = vmatprep.subr.bf16.mxu0 0
      %1852 = vmatpush1.bf16.msra.mxu0 0
      %1853 = vmatprep.subr.bf16.mxu0 0
      %1854 = vmatpush1.bf16.msra.mxu0 0
      %1855 = vmatprep.subr.bf16.mxu0 0
      %1856 = vmatpush1.bf16.msra.mxu0 %v1841
      %1857 = vmatprep.subr.bf16.mxu0 0
      %1858 = vmatpush1.bf16.msra.mxu0 %v1813
      %1859 = vmatprep.subr.bf16.mxu0 0
      %1860 = vmatpush2.bf16.msra.mxu0 0
      %1861 = vmatprep.subr.bf16.mxu0 0
      %1862 = vmatpush2.bf16.msra.mxu0 0
      %1863 = vmatprep.subr.bf16.mxu0 0
      %1864 = vmatpush2.bf16.msra.mxu0 0
      %1865 = vmatprep.subr.bf16.mxu0 0
      %1866 = vmatpush2.bf16.msra.mxu0 0
      %1867 = vmatprep.subr.bf16.mxu0 0
      %1868 = vmatpush2.bf16.msra.mxu0 0
      %1869 = vmatprep.subr.bf16.mxu0 0
      %1870 = vmatpush2.bf16.msra.mxu0 0
      %1871 = vmatprep.subr.bf16.mxu0 0
      %1872 = vmatpush2.bf16.msra.mxu0 0
      %1873 = vmatprep.subr.bf16.mxu0 0
      %1874 = vmatpush2.bf16.msra.mxu0 0
      %1875 = vmatprep.mubr.bf16.mxu0 0
      %1876 = vmatmul.mubr.bf16.gmra.mxu0 %v1817
      %v1877 = vpop.f32.mrf.mxu0
      %v1878 = vadd.f32 %v1745, %v1877
      %v1879 = vpop.f32.mrf.mxu0
      %v1880 = vpop.f32.mrf.mxu0
      %v1881 = vadd.f32 %v1748, %v1880
      %v1882 = vpop.f32.mrf.mxu0
      %1883 = vmatprep.mubr.bf16.mxu0 0
      %1884 = vmatmul.mubr.bf16.gmra.mxu0 %v1820
      %v1885 = vpop.f32.mrf.mxu0
      %v1886 = vadd.f32 %v1753, %v1885
      %v1887 = vpop.f32.mrf.mxu0
      %v1888 = vpop.f32.mrf.mxu0
      %v1889 = vadd.f32 %v1756, %v1888
      %v1890 = vpop.f32.mrf.mxu0
      %1891 = vmatprep.mubr.bf16.mxu0 0
      %1892 = vmatmul.mubr.bf16.gmra.mxu0 %v1823
      %v1893 = vpop.f32.mrf.mxu0
      %v1894 = vadd.f32 %v1761, %v1893
      %v1895 = vpop.f32.mrf.mxu0
      %v1896 = vpop.f32.mrf.mxu0
      %v1897 = vadd.f32 %v1764, %v1896
      %v1898 = vpop.f32.mrf.mxu0
      %1899 = vmatprep.mubr.bf16.mxu0 0
      %1900 = vmatmul.mubr.bf16.gmra.mxu0 %v1826
      %v1901 = vpop.f32.mrf.mxu0
      %v1902 = vadd.f32 %v1769, %v1901
      %v1903 = vpop.f32.mrf.mxu0
      %v1904 = vpop.f32.mrf.mxu0
      %v1905 = vadd.f32 %v1772, %v1904
      %v1906 = vpop.f32.mrf.mxu0
      %1907 = vmatprep.mubr.bf16.mxu0 0
      %1908 = vmatmul.mubr.bf16.gmra.mxu0 %v1829
      %v1909 = vpop.f32.mrf.mxu0
      %v1910 = vadd.f32 %v1777, %v1909
      %v1911 = vpop.f32.mrf.mxu0
      %v1912 = vpop.f32.mrf.mxu0
      %v1913 = vadd.f32 %v1780, %v1912
      %v1914 = vpop.f32.mrf.mxu0
      %1915 = vmatprep.mubr.bf16.mxu0 0
      %1916 = vmatmul.mubr.bf16.gmra.mxu0 %v1832
      %v1917 = vpop.f32.mrf.mxu0
      %v1918 = vadd.f32 %v1785, %v1917
      %v1919 = vpop.f32.mrf.mxu0
      %v1920 = vpop.f32.mrf.mxu0
      %v1921 = vadd.f32 %v1788, %v1920
      %v1922 = vpop.f32.mrf.mxu0
      %1923 = vmatprep.mubr.bf16.mxu0 0
      %1924 = vmatmul.mubr.bf16.gmra.mxu0 %v1835
      %v1925 = vpop.f32.mrf.mxu0
      %v1926 = vadd.f32 %v1793, %v1925
      %v1927 = vpop.f32.mrf.mxu0
      %v1928 = vpop.f32.mrf.mxu0
      %v1929 = vadd.f32 %v1796, %v1928
      %v1930 = vpop.f32.mrf.mxu0
      %1931 = vmatprep.mubr.bf16.mxu0 0
      %1932 = vmatmul.mubr.bf16.gmra.mxu0 %v1838
      %v1933 = vpop.f32.mrf.mxu0
      %v1934 = vadd.f32 %v1801, %v1933
      %v1935 = vpop.f32.mrf.mxu0
      %v1936 = vpop.f32.mrf.mxu0
      %v1937 = vadd.f32 %v1804, %v1936
      %v1938 = vpop.f32.mrf.mxu0
      %1939 = vdwg.mxu0
      %s1940 = scalar_lea.vmem [#allocation2], 32
      %v1941 = vld [vmem:[%s1940] sm:$0x8]
      %v1942 = vld [vmem:[%s1940 + $0x4] sm:$0xf]
      %v1943 = vld [vmem:[%s1940 + $0x8] sm:$0xf]
      %v1944 = vld [vmem:[%s1940 + $0x10] sm:$0x8]
      %v1945 = vld [vmem:[%s1940 + $0x14] sm:$0xf]
      %v1946 = vld [vmem:[%s1940 + $0x18] sm:$0xf]
      %v1947 = vld [vmem:[%s1940 + $0x20] sm:$0x8]
      %v1948 = vld [vmem:[%s1940 + $0x24] sm:$0xf]
      %v1949 = vld [vmem:[%s1940 + $0x28] sm:$0xf]
      %v1950 = vld [vmem:[%s1940 + $0x30] sm:$0x8]
      %v1951 = vld [vmem:[%s1940 + $0x34] sm:$0xf]
      %v1952 = vld [vmem:[%s1940 + $0x38] sm:$0xf]
      %v1953 = vld [vmem:[%s1940 + $0x40] sm:$0x8]
      %v1954 = vld [vmem:[%s1940 + $0x44] sm:$0xf]
      %v1955 = vld [vmem:[%s1940 + $0x48] sm:$0xf]
      %v1956 = vld [vmem:[%s1940 + $0x50] sm:$0x8]
      %v1957 = vld [vmem:[%s1940 + $0x54] sm:$0xf]
      %v1958 = vld [vmem:[%s1940 + $0x58] sm:$0xf]
      %v1959 = vld [vmem:[%s1940 + $0x60] sm:$0x8]
      %v1960 = vld [vmem:[%s1940 + $0x64] sm:$0xf]
      %v1961 = vld [vmem:[%s1940 + $0x68] sm:$0xf]
      %v1962 = vld [vmem:[%s1940 + $0x70] sm:$0x8]
      %v1963 = vld [vmem:[%s1940 + $0x74] sm:$0xf]
      %v1964 = vld [vmem:[%s1940 + $0x78] sm:$0xf]
      %v1965 = vld [vmem:[%s1940 + $0xc] sm:$0x1]
      %v1966 = vld [vmem:[%s1940 + $0x1c] sm:$0x1]
      %v1967 = vld [vmem:[%s1940 + $0x2c] sm:$0x1]
      %v1968 = vld [vmem:[%s1940 + $0x3c] sm:$0x1]
      %v1969 = vld [vmem:[%s1940 + $0x4c] sm:$0x1]
      %v1970 = vld [vmem:[%s1940 + $0x5c] sm:$0x1]
      %v1971 = vld [vmem:[%s1940 + $0x6c] sm:$0x1]
      %v1972 = vld [vmem:[%s1940 + $0x7c] sm:$0x1]
      %v1997 = vunpack.c.l.b16 %v1941
      %v1998 = vunpack.c.l.b16 %v1942
      %v1999 = vunpack.c.l.b16 %v1943
      %v2000 = vunpack.c.l.b16 %v1944
      %v2001 = vunpack.c.l.b16 %v1945
      %v2002 = vunpack.c.l.b16 %v1946
      %v2003 = vunpack.c.l.b16 %v1947
      %v2004 = vunpack.c.l.b16 %v1948
      %v2005 = vunpack.c.l.b16 %v1949
      %v2006 = vunpack.c.l.b16 %v1950
      %v2007 = vunpack.c.l.b16 %v1951
      %v2008 = vunpack.c.l.b16 %v1952
      %v2009 = vunpack.c.l.b16 %v1953
      %v2010 = vunpack.c.l.b16 %v1954
      %v2011 = vunpack.c.l.b16 %v1955
      %v2012 = vunpack.c.l.b16 %v1956
      %v2013 = vunpack.c.l.b16 %v1957
      %v2014 = vunpack.c.l.b16 %v1958
      %v2015 = vunpack.c.l.b16 %v1959
      %v2016 = vunpack.c.l.b16 %v1960
      %v2017 = vunpack.c.l.b16 %v1961
      %v2018 = vunpack.c.l.b16 %v1962
      %v2019 = vunpack.c.l.b16 %v1963
      %v2020 = vunpack.c.l.b16 %v1964
      %v2021 = vpack.c.b16 %v1998, %v1997
      %v2022 = vpack.c.b16 %v1999, %v1999
      %v2023 = vpack.c.b16 %v2001, %v2000
      %v2024 = vpack.c.b16 %v2002, %v2002
      %v2025 = vpack.c.b16 %v2004, %v2003
      %v2026 = vpack.c.b16 %v2005, %v2005
      %v2027 = vpack.c.b16 %v2007, %v2006
      %v2028 = vpack.c.b16 %v2008, %v2008
      %v2029 = vpack.c.b16 %v2010, %v2009
      %v2030 = vpack.c.b16 %v2011, %v2011
      %v2031 = vpack.c.b16 %v2013, %v2012
      %v2032 = vpack.c.b16 %v2014, %v2014
      %v2033 = vpack.c.b16 %v2016, %v2015
      %v2034 = vpack.c.b16 %v2017, %v2017
      %v2035 = vpack.c.b16 %v2019, %v2018
      %v2036 = vpack.c.b16 %v2020, %v2020
      %v2037 = vpack.c.b16 %v1999, %v1998
      %v2038 = vpack.c.b16 %v2002, %v2001
      %v2039 = vpack.c.b16 %v2005, %v2004
      %v2040 = vpack.c.b16 %v2008, %v2007
      %v2041 = vpack.c.b16 %v2011, %v2010
      %v2042 = vpack.c.b16 %v2014, %v2013
      %v2043 = vpack.c.b16 %v2017, %v2016
      %v2044 = vpack.c.b16 %v2020, %v2019
      %v2046 = vshrl.u32 %v2037, 16
      %v2048 = vrot.slane %v2046, 4
      %v2049 = vshll.u32 %v2037, 16
      %v2051 = vrot.slane %v2049, 5
      %v2052 = vor.u32 %v2048, %v2051
      %v2054 = vshrl.u32 %v2038, 16
      %v2056 = vrot.slane %v2054, 4
      %v2057 = vshll.u32 %v2038, 16
      %v2059 = vrot.slane %v2057, 5
      %v2060 = vor.u32 %v2056, %v2059
      %v2062 = vshrl.u32 %v2039, 16
      %v2064 = vrot.slane %v2062, 4
      %v2065 = vshll.u32 %v2039, 16
      %v2067 = vrot.slane %v2065, 5
      %v2068 = vor.u32 %v2064, %v2067
      %v2070 = vshrl.u32 %v2040, 16
      %v2072 = vrot.slane %v2070, 4
      %v2073 = vshll.u32 %v2040, 16
      %v2075 = vrot.slane %v2073, 5
      %v2076 = vor.u32 %v2072, %v2075
      %v2078 = vshrl.u32 %v2041, 16
      %v2080 = vrot.slane %v2078, 4
      %v2081 = vshll.u32 %v2041, 16
      %v2083 = vrot.slane %v2081, 5
      %v2084 = vor.u32 %v2080, %v2083
      %v2086 = vshrl.u32 %v2042, 16
      %v2088 = vrot.slane %v2086, 4
      %v2089 = vshll.u32 %v2042, 16
      %v2091 = vrot.slane %v2089, 5
      %v2092 = vor.u32 %v2088, %v2091
      %v2094 = vshrl.u32 %v2043, 16
      %v2096 = vrot.slane %v2094, 4
      %v2097 = vshll.u32 %v2043, 16
      %v2099 = vrot.slane %v2097, 5
      %v2100 = vor.u32 %v2096, %v2099
      %v2102 = vshrl.u32 %v2044, 16
      %v2104 = vrot.slane %v2102, 4
      %v2105 = vshll.u32 %v2044, 16
      %v2107 = vrot.slane %v2105, 5
      %v2108 = vor.u32 %v2104, %v2107
      %2109 = vrot.lane.b32.xlu0 %v2052, 8
      %v2110 = vpop.permute.xlu0 %2109
      %2111 = vrot.lane.b32.xlu0 %v2060, 8
      %v2112 = vpop.permute.xlu0 %2111
      %2113 = vrot.lane.b32.xlu0 %v2068, 8
      %v2114 = vpop.permute.xlu0 %2113
      %2115 = vrot.lane.b32.xlu0 %v2076, 8
      %v2116 = vpop.permute.xlu0 %2115
      %2117 = vrot.lane.b32.xlu0 %v2084, 8
      %v2118 = vpop.permute.xlu0 %2117
      %2119 = vrot.lane.b32.xlu0 %v2092, 8
      %v2120 = vpop.permute.xlu0 %2119
      %2121 = vrot.lane.b32.xlu0 %v2100, 8
      %v2122 = vpop.permute.xlu0 %2121
      %2123 = vrot.lane.b32.xlu0 %v2108, 8
      %v2124 = vpop.permute.xlu0 %2123
      %v2133 = vunpack.c.l.b16 %v1965
      %v2134 = vunpack.c.l.b16 %v1966
      %v2135 = vunpack.c.l.b16 %v1967
      %v2136 = vunpack.c.l.b16 %v1968
      %v2137 = vunpack.c.l.b16 %v1969
      %v2138 = vunpack.c.l.b16 %v1970
      %v2139 = vunpack.c.l.b16 %v1971
      %v2140 = vunpack.c.l.b16 %v1972
      %v2141 = vpack.c.b16 %v2133, %v2133
      %v2142 = vpack.c.b16 %v2134, %v2134
      %v2143 = vpack.c.b16 %v2135, %v2135
      %v2144 = vpack.c.b16 %v2136, %v2136
      %v2145 = vpack.c.b16 %v2137, %v2137
      %v2146 = vpack.c.b16 %v2138, %v2138
      %v2147 = vpack.c.b16 %v2139, %v2139
      %v2148 = vpack.c.b16 %v2140, %v2140
      %v2149 = vrot.slane %v2037, 5
      %v2150 = vrot.slane %v2141, 5
      %v2151 = vsel %vm957, %v2149, %v2150
      %v2152 = vrot.slane %v2038, 5
      %v2153 = vrot.slane %v2142, 5
      %v2154 = vsel %vm957, %v2152, %v2153
      %v2155 = vrot.slane %v2039, 5
      %v2156 = vrot.slane %v2143, 5
      %v2157 = vsel %vm957, %v2155, %v2156
      %v2158 = vrot.slane %v2040, 5
      %v2159 = vrot.slane %v2144, 5
      %v2160 = vsel %vm957, %v2158, %v2159
      %v2161 = vrot.slane %v2041, 5
      %v2162 = vrot.slane %v2145, 5
      %v2163 = vsel %vm957, %v2161, %v2162
      %v2164 = vrot.slane %v2042, 5
      %v2165 = vrot.slane %v2146, 5
      %v2166 = vsel %vm957, %v2164, %v2165
      %v2167 = vrot.slane %v2043, 5
      %v2168 = vrot.slane %v2147, 5
      %v2169 = vsel %vm957, %v2167, %v2168
      %v2170 = vrot.slane %v2044, 5
      %v2171 = vrot.slane %v2148, 5
      %v2172 = vsel %vm957, %v2170, %v2171
      %2173 = vrot.lane.b32.xlu0 %v2149, 16
      %v2174 = vpop.permute.xlu0 %2173
      %2175 = vrot.lane.b32.xlu0 %v2151, 16
      %v2176 = vpop.permute.xlu0 %2175
      %2177 = vrot.lane.b32.xlu0 %v2152, 16
      %v2178 = vpop.permute.xlu0 %2177
      %2179 = vrot.lane.b32.xlu0 %v2154, 16
      %v2180 = vpop.permute.xlu0 %2179
      %2181 = vrot.lane.b32.xlu0 %v2155, 16
      %v2182 = vpop.permute.xlu0 %2181
      %2183 = vrot.lane.b32.xlu0 %v2157, 16
      %v2184 = vpop.permute.xlu0 %2183
      %2185 = vrot.lane.b32.xlu0 %v2158, 16
      %v2186 = vpop.permute.xlu0 %2185
      %2187 = vrot.lane.b32.xlu0 %v2160, 16
      %v2188 = vpop.permute.xlu0 %2187
      %2189 = vrot.lane.b32.xlu0 %v2161, 16
      %v2190 = vpop.permute.xlu0 %2189
      %2191 = vrot.lane.b32.xlu0 %v2163, 16
      %v2192 = vpop.permute.xlu0 %2191
      %2193 = vrot.lane.b32.xlu0 %v2164, 16
      %v2194 = vpop.permute.xlu0 %2193
      %2195 = vrot.lane.b32.xlu0 %v2166, 16
      %v2196 = vpop.permute.xlu0 %2195
      %2197 = vrot.lane.b32.xlu0 %v2167, 16
      %v2198 = vpop.permute.xlu0 %2197
      %2199 = vrot.lane.b32.xlu0 %v2169, 16
      %v2200 = vpop.permute.xlu0 %2199
      %2201 = vrot.lane.b32.xlu0 %v2170, 16
      %v2202 = vpop.permute.xlu0 %2201
      %2203 = vrot.lane.b32.xlu0 %v2172, 16
      %v2204 = vpop.permute.xlu0 %2203
      %v2207 = vsel %vm1014, %v2021, %v2110
      %v2209 = vsel %vm1014, %v2022, %v2110
      %v2212 = vsel %vm1014, %v2023, %v2112
      %v2214 = vsel %vm1014, %v2024, %v2112
      %v2217 = vsel %vm1014, %v2025, %v2114
      %v2219 = vsel %vm1014, %v2026, %v2114
      %v2222 = vsel %vm1014, %v2027, %v2116
      %v2224 = vsel %vm1014, %v2028, %v2116
      %v2227 = vsel %vm1014, %v2029, %v2118
      %v2229 = vsel %vm1014, %v2030, %v2118
      %v2232 = vsel %vm1014, %v2031, %v2120
      %v2234 = vsel %vm1014, %v2032, %v2120
      %v2237 = vsel %vm1014, %v2033, %v2122
      %v2239 = vsel %vm1014, %v2034, %v2122
      %v2242 = vsel %vm1014, %v2035, %v2124
      %v2244 = vsel %vm1014, %v2036, %v2124
      %v2246 = vsel %vm1055, %v2207, %v2174
      %v2248 = vsel %vm1055, %v2209, %v2176
      %v2250 = vsel %vm1055, %v2212, %v2178
      %v2252 = vsel %vm1055, %v2214, %v2180
      %v2254 = vsel %vm1055, %v2217, %v2182
      %v2256 = vsel %vm1055, %v2219, %v2184
      %v2258 = vsel %vm1055, %v2222, %v2186
      %v2260 = vsel %vm1055, %v2224, %v2188
      %v2262 = vsel %vm1055, %v2227, %v2190
      %v2264 = vsel %vm1055, %v2229, %v2192
      %v2266 = vsel %vm1055, %v2232, %v2194
      %v2268 = vsel %vm1055, %v2234, %v2196
      %v2270 = vsel %vm1055, %v2237, %v2198
      %v2272 = vsel %vm1055, %v2239, %v2200
      %v2274 = vsel %vm1055, %v2242, %v2202
      %v2276 = vsel %vm1055, %v2244, %v2204
      %v2277 = vshrl.u32 %v2246, 16
      %v2279 = vrot.slane %v2277, 3
      %v2280 = vshll.u32 %v2246, 16
      %v2282 = vrot.slane %v2280, 4
      %v2283 = vor.u32 %v2279, %v2282
      %v2284 = vshrl.u32 %v2248, 16
      %v2286 = vrot.slane %v2284, 3
      %v2287 = vshll.u32 %v2248, 16
      %v2289 = vrot.slane %v2287, 4
      %v2290 = vor.u32 %v2286, %v2289
      %v2291 = vsel %vm1088, %v2283, %v2290
      %v2292 = vshrl.u32 %v2250, 16
      %v2294 = vrot.slane %v2292, 3
      %v2295 = vshll.u32 %v2250, 16
      %v2297 = vrot.slane %v2295, 4
      %v2298 = vor.u32 %v2294, %v2297
      %v2299 = vshrl.u32 %v2252, 16
      %v2301 = vrot.slane %v2299, 3
      %v2302 = vshll.u32 %v2252, 16
      %v2304 = vrot.slane %v2302, 4
      %v2305 = vor.u32 %v2301, %v2304
      %v2306 = vsel %vm1088, %v2298, %v2305
      %v2307 = vshrl.u32 %v2254, 16
      %v2309 = vrot.slane %v2307, 3
      %v2310 = vshll.u32 %v2254, 16
      %v2312 = vrot.slane %v2310, 4
      %v2313 = vor.u32 %v2309, %v2312
      %v2314 = vshrl.u32 %v2256, 16
      %v2316 = vrot.slane %v2314, 3
      %v2317 = vshll.u32 %v2256, 16
      %v2319 = vrot.slane %v2317, 4
      %v2320 = vor.u32 %v2316, %v2319
      %v2321 = vsel %vm1088, %v2313, %v2320
      %v2322 = vshrl.u32 %v2258, 16
      %v2324 = vrot.slane %v2322, 3
      %v2325 = vshll.u32 %v2258, 16
      %v2327 = vrot.slane %v2325, 4
      %v2328 = vor.u32 %v2324, %v2327
      %v2329 = vshrl.u32 %v2260, 16
      %v2331 = vrot.slane %v2329, 3
      %v2332 = vshll.u32 %v2260, 16
      %v2334 = vrot.slane %v2332, 4
      %v2335 = vor.u32 %v2331, %v2334
      %v2336 = vsel %vm1088, %v2328, %v2335
      %v2337 = vshrl.u32 %v2262, 16
      %v2339 = vrot.slane %v2337, 3
      %v2340 = vshll.u32 %v2262, 16
      %v2342 = vrot.slane %v2340, 4
      %v2343 = vor.u32 %v2339, %v2342
      %v2344 = vshrl.u32 %v2264, 16
      %v2346 = vrot.slane %v2344, 3
      %v2347 = vshll.u32 %v2264, 16
      %v2349 = vrot.slane %v2347, 4
      %v2350 = vor.u32 %v2346, %v2349
      %v2351 = vsel %vm1088, %v2343, %v2350
      %v2352 = vshrl.u32 %v2266, 16
      %v2354 = vrot.slane %v2352, 3
      %v2355 = vshll.u32 %v2266, 16
      %v2357 = vrot.slane %v2355, 4
      %v2358 = vor.u32 %v2354, %v2357
      %v2359 = vshrl.u32 %v2268, 16
      %v2361 = vrot.slane %v2359, 3
      %v2362 = vshll.u32 %v2268, 16
      %v2364 = vrot.slane %v2362, 4
      %v2365 = vor.u32 %v2361, %v2364
      %v2366 = vsel %vm1088, %v2358, %v2365
      %v2367 = vshrl.u32 %v2270, 16
      %v2369 = vrot.slane %v2367, 3
      %v2370 = vshll.u32 %v2270, 16
      %v2372 = vrot.slane %v2370, 4
      %v2373 = vor.u32 %v2369, %v2372
      %v2374 = vshrl.u32 %v2272, 16
      %v2376 = vrot.slane %v2374, 3
      %v2377 = vshll.u32 %v2272, 16
      %v2379 = vrot.slane %v2377, 4
      %v2380 = vor.u32 %v2376, %v2379
      %v2381 = vsel %vm1088, %v2373, %v2380
      %v2382 = vshrl.u32 %v2274, 16
      %v2384 = vrot.slane %v2382, 3
      %v2385 = vshll.u32 %v2274, 16
      %v2387 = vrot.slane %v2385, 4
      %v2388 = vor.u32 %v2384, %v2387
      %v2389 = vshrl.u32 %v2276, 16
      %v2391 = vrot.slane %v2389, 3
      %v2392 = vshll.u32 %v2276, 16
      %v2394 = vrot.slane %v2392, 4
      %v2395 = vor.u32 %v2391, %v2394
      %v2396 = vsel %vm1088, %v2388, %v2395
      %s2397 = scalar_lea.vmem %s6, 24
      %v2398 = vld [vmem:[%s2397] sm:$0xf]
      %v2399 = vld [vmem:[%s2397 + $0x4] sm:$0xf]
      %v2400 = vld [vmem:[%s2397 + $0x8] sm:$0xf]
      %v2404 = vunpack.c.l.b16 %v2398
      %v2405 = vunpack.c.l.b16 %v2399
      %v2406 = vunpack.c.l.b16 %v2400
      %v2407 = vpack.c.b16 %v2405, %v2404
      %v2408 = vpack.c.b16 %v2406, %v2406
      %v2411 = vsel %vm1681, %v2291, 0
      %v2414 = vsel %vm1681, %v2306, 0
      %v2417 = vsel %vm1681, %v2321, 0
      %v2420 = vsel %vm1681, %v2336, 0
      %v2423 = vsel %vm1681, %v2351, 0
      %v2426 = vsel %vm1681, %v2366, 0
      %v2429 = vsel %vm1681, %v2381, 0
      %v2432 = vsel %vm1681, %v2396, 0
      %v2435 = vsel %vm1706, %v2408, 0
      %2437 = vmatprep.subr.bf16.mxu0 0
      %2438 = vmatpush1.bf16.msra.mxu0 0
      %2439 = vmatprep.subr.bf16.mxu0 0
      %2440 = vmatpush1.bf16.msra.mxu0 0
      %2441 = vmatprep.subr.bf16.mxu0 0
      %2442 = vmatpush1.bf16.msra.mxu0 0
      %2443 = vmatprep.subr.bf16.mxu0 0
      %2444 = vmatpush1.bf16.msra.mxu0 0
      %2445 = vmatprep.subr.bf16.mxu0 0
      %2446 = vmatpush1.bf16.msra.mxu0 0
      %2447 = vmatprep.subr.bf16.mxu0 0
      %2448 = vmatpush1.bf16.msra.mxu0 0
      %2449 = vmatprep.subr.bf16.mxu0 0
      %2450 = vmatpush1.bf16.msra.mxu0 %v2435
      %2451 = vmatprep.subr.bf16.mxu0 0
      %2452 = vmatpush1.bf16.msra.mxu0 %v2407
      %2453 = vmatprep.subr.bf16.mxu0 0
      %2454 = vmatpush2.bf16.msra.mxu0 0
      %2455 = vmatprep.subr.bf16.mxu0 0
      %2456 = vmatpush2.bf16.msra.mxu0 0
      %2457 = vmatprep.subr.bf16.mxu0 0
      %2458 = vmatpush2.bf16.msra.mxu0 0
      %2459 = vmatprep.subr.bf16.mxu0 0
      %2460 = vmatpush2.bf16.msra.mxu0 0
      %2461 = vmatprep.subr.bf16.mxu0 0
      %2462 = vmatpush2.bf16.msra.mxu0 0
      %2463 = vmatprep.subr.bf16.mxu0 0
      %2464 = vmatpush2.bf16.msra.mxu0 0
      %2465 = vmatprep.subr.bf16.mxu0 0
      %2466 = vmatpush2.bf16.msra.mxu0 0
      %2467 = vmatprep.subr.bf16.mxu0 0
      %2468 = vmatpush2.bf16.msra.mxu0 0
      %2469 = vmatprep.mubr.bf16.mxu0 0
      %2470 = vmatmul.mubr.bf16.gmra.mxu0 %v2411
      %v2471 = vpop.f32.mrf.mxu0
      %v2472 = vadd.f32 0.0, %v2471
      %v2473 = vpop.f32.mrf.mxu0
      %v2474 = vpop.f32.mrf.mxu0
      %v2475 = vadd.f32 0.0, %v2474
      %v2476 = vpop.f32.mrf.mxu0
      %2477 = vmatprep.mubr.bf16.mxu0 0
      %2478 = vmatmul.mubr.bf16.gmra.mxu0 %v2414
      %v2479 = vpop.f32.mrf.mxu0
      %v2480 = vadd.f32 0.0, %v2479
      %v2481 = vpop.f32.mrf.mxu0
      %v2482 = vpop.f32.mrf.mxu0
      %v2483 = vadd.f32 0.0, %v2482
      %v2484 = vpop.f32.mrf.mxu0
      %2485 = vmatprep.mubr.bf16.mxu0 0
      %2486 = vmatmul.mubr.bf16.gmra.mxu0 %v2417
      %v2487 = vpop.f32.mrf.mxu0
      %v2488 = vadd.f32 0.0, %v2487
      %v2489 = vpop.f32.mrf.mxu0
      %v2490 = vpop.f32.mrf.mxu0
      %v2491 = vadd.f32 0.0, %v2490
      %v2492 = vpop.f32.mrf.mxu0
      %2493 = vmatprep.mubr.bf16.mxu0 0
      %2494 = vmatmul.mubr.bf16.gmra.mxu0 %v2420
      %v2495 = vpop.f32.mrf.mxu0
      %v2496 = vadd.f32 0.0, %v2495
      %v2497 = vpop.f32.mrf.mxu0
      %v2498 = vpop.f32.mrf.mxu0
      %v2499 = vadd.f32 0.0, %v2498
      %v2500 = vpop.f32.mrf.mxu0
      %2501 = vmatprep.mubr.bf16.mxu0 0
      %2502 = vmatmul.mubr.bf16.gmra.mxu0 %v2423
      %v2503 = vpop.f32.mrf.mxu0
      %v2504 = vadd.f32 0.0, %v2503
      %v2505 = vpop.f32.mrf.mxu0
      %v2506 = vpop.f32.mrf.mxu0
      %v2507 = vadd.f32 0.0, %v2506
      %v2508 = vpop.f32.mrf.mxu0
      %2509 = vmatprep.mubr.bf16.mxu0 0
      %2510 = vmatmul.mubr.bf16.gmra.mxu0 %v2426
      %v2511 = vpop.f32.mrf.mxu0
      %v2512 = vadd.f32 0.0, %v2511
      %v2513 = vpop.f32.mrf.mxu0
      %v2514 = vpop.f32.mrf.mxu0
      %v2515 = vadd.f32 0.0, %v2514
      %v2516 = vpop.f32.mrf.mxu0
      %2517 = vmatprep.mubr.bf16.mxu0 0
      %2518 = vmatmul.mubr.bf16.gmra.mxu0 %v2429
      %v2519 = vpop.f32.mrf.mxu0
      %v2520 = vadd.f32 0.0, %v2519
      %v2521 = vpop.f32.mrf.mxu0
      %v2522 = vpop.f32.mrf.mxu0
      %v2523 = vadd.f32 0.0, %v2522
      %v2524 = vpop.f32.mrf.mxu0
      %2525 = vmatprep.mubr.bf16.mxu0 0
      %2526 = vmatmul.mubr.bf16.gmra.mxu0 %v2432
      %v2527 = vpop.f32.mrf.mxu0
      %v2528 = vadd.f32 0.0, %v2527
      %v2529 = vpop.f32.mrf.mxu0
      %v2530 = vpop.f32.mrf.mxu0
      %v2531 = vadd.f32 0.0, %v2530
      %v2532 = vpop.f32.mrf.mxu0
      %2533 = vdwg.mxu0
      %v2534 = vadd.f32 %v1878, %v2472
      %v2535 = vadd.f32 %v1881, %v2475
      %v2536 = vadd.f32 %v1886, %v2480
      %v2537 = vadd.f32 %v1889, %v2483
      %v2538 = vadd.f32 %v1894, %v2488
      %v2539 = vadd.f32 %v1897, %v2491
      %v2540 = vadd.f32 %v1902, %v2496
      %v2541 = vadd.f32 %v1905, %v2499
      %v2542 = vadd.f32 %v1910, %v2504
      %v2543 = vadd.f32 %v1913, %v2507
      %v2544 = vadd.f32 %v1918, %v2512
      %v2545 = vadd.f32 %v1921, %v2515
      %v2546 = vadd.f32 %v1926, %v2520
      %v2547 = vadd.f32 %v1929, %v2523
      %v2548 = vadd.f32 %v1934, %v2528
      %v2549 = vadd.f32 %v1937, %v2531
      %v2550 = vld [vmem:[%s556] sm:$0x1]
      %v2552 = vlaneseq
      %v2553 = vshrl.u32 %v2552, 7
      %v2554 = vsub.s32 0, %v2553
      %v2555 = vrot.slane %v2550, %v2554
      %v2557 = vmul.f32 %v2534, %v2555
      %v2558 = vmul.f32 %v2535, %v2555
      %v2559 = vmul.f32 %v2536, %v2555
      %v2560 = vmul.f32 %v2537, %v2555
      %v2561 = vmul.f32 %v2538, %v2555
      %v2562 = vmul.f32 %v2539, %v2555
      %v2563 = vmul.f32 %v2540, %v2555
      %v2564 = vmul.f32 %v2541, %v2555
      %v2565 = vmul.f32 %v2542, %v2555
      %v2566 = vmul.f32 %v2543, %v2555
      %v2567 = vmul.f32 %v2544, %v2555
      %v2568 = vmul.f32 %v2545, %v2555
      %v2569 = vmul.f32 %v2546, %v2555
      %v2570 = vmul.f32 %v2547, %v2555
      %v2571 = vmul.f32 %v2548, %v2555
      %v2572 = vmul.f32 %v2549, %v2555
      %v2573 = vld [vmem:[%s7] sm:$0x1]
      %v2575 = vlaneseq
      %v2576 = vshrl.u32 %v2575, 7
      %v2577 = vsub.s32 0, %v2576
      %v2578 = vrot.slane %v2573, %v2577
      %v2580 = vadd.f32 %v2557, %v2578
      %v2581 = vadd.f32 %v2558, %v2578
      %v2582 = vadd.f32 %v2559, %v2578
      %v2583 = vadd.f32 %v2560, %v2578
      %v2584 = vadd.f32 %v2561, %v2578
      %v2585 = vadd.f32 %v2562, %v2578
      %v2586 = vadd.f32 %v2563, %v2578
      %v2587 = vadd.f32 %v2564, %v2578
      %v2588 = vadd.f32 %v2565, %v2578
      %v2589 = vadd.f32 %v2566, %v2578
      %v2590 = vadd.f32 %v2567, %v2578
      %v2591 = vadd.f32 %v2568, %v2578
      %v2592 = vadd.f32 %v2569, %v2578
      %v2593 = vadd.f32 %v2570, %v2578
      %v2594 = vadd.f32 %v2571, %v2578
      %v2595 = vadd.f32 %v2572, %v2578
      %v2596 = vld [vmem:[%s8] sm:$0x1]
      %v2597 = vld [vmem:[%s549] sm:$0xff]
      %v2598 = vld [vmem:[%s549 + $0x8] sm:$0xff]
      %v2599 = vld [vmem:[%s549 + $0x10] sm:$0xff]
      %v2600 = vld [vmem:[%s549 + $0x18] sm:$0xff]
      %v2601 = vld [vmem:[%s549 + $0x20] sm:$0xff]
      %v2602 = vld [vmem:[%s549 + $0x28] sm:$0xff]
      %v2603 = vld [vmem:[%s549 + $0x30] sm:$0xff]
      %v2604 = vld [vmem:[%s549 + $0x38] sm:$0xff]
      %v2605 = vld [vmem:[%s549 + $0x40] sm:$0xff]
      %v2606 = vld [vmem:[%s549 + $0x48] sm:$0xff]
      %v2607 = vld [vmem:[%s549 + $0x50] sm:$0xff]
      %v2608 = vld [vmem:[%s549 + $0x58] sm:$0xff]
      %v2609 = vld [vmem:[%s549 + $0x60] sm:$0xff]
      %v2610 = vld [vmem:[%s549 + $0x68] sm:$0xff]
      %v2611 = vld [vmem:[%s549 + $0x70] sm:$0xff]
      %v2612 = vld [vmem:[%s549 + $0x78] sm:$0xff]
      %v2614 = vlaneseq
      %v2615 = vshrl.u32 %v2614, 7
      %v2616 = vsub.s32 0, %v2615
      %v2617 = vrot.slane %v2596, %v2616
      %2620 = vset.pattern.permute.xlu0 0
      %2621 = vperm.xlu0 %2620, %v2597
      %v2622 = vpop.permute.xlu0 %2621
      %2625 = vset.pattern.permute.xlu0 0
      %2626 = vperm.xlu0 %2625, %v2598
      %v2627 = vpop.permute.xlu0 %2626
      %2630 = vset.pattern.permute.xlu0 0
      %2631 = vperm.xlu0 %2630, %v2599
      %v2632 = vpop.permute.xlu0 %2631
      %2635 = vset.pattern.permute.xlu0 0
      %2636 = vperm.xlu0 %2635, %v2600
      %v2637 = vpop.permute.xlu0 %2636
      %2640 = vset.pattern.permute.xlu0 0
      %2641 = vperm.xlu0 %2640, %v2601
      %v2642 = vpop.permute.xlu0 %2641
      %2645 = vset.pattern.permute.xlu0 0
      %2646 = vperm.xlu0 %2645, %v2602
      %v2647 = vpop.permute.xlu0 %2646
      %2650 = vset.pattern.permute.xlu0 0
      %2651 = vperm.xlu0 %2650, %v2603
      %v2652 = vpop.permute.xlu0 %2651
      %2655 = vset.pattern.permute.xlu0 0
      %2656 = vperm.xlu0 %2655, %v2604
      %v2657 = vpop.permute.xlu0 %2656
      %2660 = vset.pattern.permute.xlu0 0
      %2661 = vperm.xlu0 %2660, %v2605
      %v2662 = vpop.permute.xlu0 %2661
      %2665 = vset.pattern.permute.xlu0 0
      %2666 = vperm.xlu0 %2665, %v2606
      %v2667 = vpop.permute.xlu0 %2666
      %2670 = vset.pattern.permute.xlu0 0
      %2671 = vperm.xlu0 %2670, %v2607
      %v2672 = vpop.permute.xlu0 %2671
      %2675 = vset.pattern.permute.xlu0 0
      %2676 = vperm.xlu0 %2675, %v2608
      %v2677 = vpop.permute.xlu0 %2676
      %2680 = vset.pattern.permute.xlu0 0
      %2681 = vperm.xlu0 %2680, %v2609
      %v2682 = vpop.permute.xlu0 %2681
      %2685 = vset.pattern.permute.xlu0 0
      %2686 = vperm.xlu0 %2685, %v2610
      %v2687 = vpop.permute.xlu0 %2686
      %2690 = vset.pattern.permute.xlu0 0
      %2691 = vperm.xlu0 %2690, %v2611
      %v2692 = vpop.permute.xlu0 %2691
      %2695 = vset.pattern.permute.xlu0 0
      %2696 = vperm.xlu0 %2695, %v2612
      %v2697 = vpop.permute.xlu0 %2696
      %v2699 = vmul.f32 %v2617, %v2622
      %v2700 = vmul.f32 %v2617, %v2627
      %v2701 = vmul.f32 %v2617, %v2632
      %v2702 = vmul.f32 %v2617, %v2637
      %v2703 = vmul.f32 %v2617, %v2642
      %v2704 = vmul.f32 %v2617, %v2647
      %v2705 = vmul.f32 %v2617, %v2652
      %v2706 = vmul.f32 %v2617, %v2657
      %v2707 = vmul.f32 %v2617, %v2662
      %v2708 = vmul.f32 %v2617, %v2667
      %v2709 = vmul.f32 %v2617, %v2672
      %v2710 = vmul.f32 %v2617, %v2677
      %v2711 = vmul.f32 %v2617, %v2682
      %v2712 = vmul.f32 %v2617, %v2687
      %v2713 = vmul.f32 %v2617, %v2692
      %v2714 = vmul.f32 %v2617, %v2697
      %v2715 = vadd.f32 %v2580, %v2699
      %v2716 = vadd.f32 %v2581, %v2700
      %v2717 = vadd.f32 %v2582, %v2701
      %v2718 = vadd.f32 %v2583, %v2702
      %v2719 = vadd.f32 %v2584, %v2703
      %v2720 = vadd.f32 %v2585, %v2704
      %v2721 = vadd.f32 %v2586, %v2705
      %v2722 = vadd.f32 %v2587, %v2706
      %v2723 = vadd.f32 %v2588, %v2707
      %v2724 = vadd.f32 %v2589, %v2708
      %v2725 = vadd.f32 %v2590, %v2709
      %v2726 = vadd.f32 %v2591, %v2710
      %v2727 = vadd.f32 %v2592, %v2711
      %v2728 = vadd.f32 %v2593, %v2712
      %v2729 = vadd.f32 %v2594, %v2713
      %v2730 = vadd.f32 %v2595, %v2714
      %v2731 = vmul.f32 %v2715, 0.2
      %v2732 = vmul.f32 %v2716, 0.2
      %v2733 = vmul.f32 %v2717, 0.2
      %v2734 = vmul.f32 %v2718, 0.2
      %v2735 = vmul.f32 %v2719, 0.2
      %v2736 = vmul.f32 %v2720, 0.2
      %v2737 = vmul.f32 %v2721, 0.2
      %v2738 = vmul.f32 %v2722, 0.2
      %v2739 = vmul.f32 %v2723, 0.2
      %v2740 = vmul.f32 %v2724, 0.2
      %v2741 = vmul.f32 %v2725, 0.2
      %v2742 = vmul.f32 %v2726, 0.2
      %v2743 = vmul.f32 %v2727, 0.2
      %v2744 = vmul.f32 %v2728, 0.2
      %v2745 = vmul.f32 %v2729, 0.2
      %v2746 = vmul.f32 %v2730, 0.2
      %v2747 = vmax.f32 %v2715, %v2731
      %v2748 = vmax.f32 %v2716, %v2732
      %v2749 = vmax.f32 %v2717, %v2733
      %v2750 = vmax.f32 %v2718, %v2734
      %v2751 = vmax.f32 %v2719, %v2735
      %v2752 = vmax.f32 %v2720, %v2736
      %v2753 = vmax.f32 %v2721, %v2737
      %v2754 = vmax.f32 %v2722, %v2738
      %v2755 = vmax.f32 %v2723, %v2739
      %v2756 = vmax.f32 %v2724, %v2740
      %v2757 = vmax.f32 %v2725, %v2741
      %v2758 = vmax.f32 %v2726, %v2742
      %v2759 = vmax.f32 %v2727, %v2743
      %v2760 = vmax.f32 %v2728, %v2744
      %v2761 = vmax.f32 %v2729, %v2745
      %v2762 = vmax.f32 %v2730, %v2746
      %v2763 = vpack.c.bf16 %v2748, %v2747
      %v2764 = vpack.c.bf16 %v2750, %v2749
      %v2765 = vpack.c.bf16 %v2752, %v2751
      %v2766 = vpack.c.bf16 %v2754, %v2753
      %v2767 = vpack.c.bf16 %v2756, %v2755
      %v2768 = vpack.c.bf16 %v2758, %v2757
      %v2769 = vpack.c.bf16 %v2760, %v2759
      %v2770 = vpack.c.bf16 %v2762, %v2761
      %v2779 = vunpack.c.l.b16 %v2763
      %v2780 = vunpack.c.h.b16 %v2763
      %v2781 = vunpack.c.l.b16 %v2764
      %v2782 = vunpack.c.h.b16 %v2764
      %v2783 = vunpack.c.l.b16 %v2765
      %v2784 = vunpack.c.h.b16 %v2765
      %v2785 = vunpack.c.l.b16 %v2766
      %v2786 = vunpack.c.h.b16 %v2766
      %v2787 = vunpack.c.l.b16 %v2767
      %v2788 = vunpack.c.h.b16 %v2767
      %v2789 = vunpack.c.l.b16 %v2768
      %v2790 = vunpack.c.h.b16 %v2768
      %v2791 = vunpack.c.l.b16 %v2769
      %v2792 = vunpack.c.h.b16 %v2769
      %v2793 = vunpack.c.l.b16 %v2770
      %v2794 = vunpack.c.h.b16 %v2770
      %v2795 = vpack.c.b16 %v2779, %v2779
      %v2796 = vpack.c.b16 %v2780, %v2780
      %v2797 = vpack.c.b16 %v2781, %v2781
      %v2798 = vpack.c.b16 %v2782, %v2782
      %v2799 = vpack.c.b16 %v2783, %v2783
      %v2800 = vpack.c.b16 %v2784, %v2784
      %v2801 = vpack.c.b16 %v2785, %v2785
      %v2802 = vpack.c.b16 %v2786, %v2786
      %v2803 = vpack.c.b16 %v2787, %v2787
      %v2804 = vpack.c.b16 %v2788, %v2788
      %v2805 = vpack.c.b16 %v2789, %v2789
      %v2806 = vpack.c.b16 %v2790, %v2790
      %v2807 = vpack.c.b16 %v2791, %v2791
      %v2808 = vpack.c.b16 %v2792, %v2792
      %v2809 = vpack.c.b16 %v2793, %v2793
      %v2810 = vpack.c.b16 %v2794, %v2794
      %2827 = vst.msk [vmem:[%s566] sm:$0xf] %vm570, %v2795
      %2828 = vst.msk [vmem:[%s566 + $0x4] sm:$0xf] %vm570, %v2796
      %2829 = vst.msk [vmem:[%s566 + $0x8] sm:$0xf] %vm570, %v2797
      %2830 = vst.msk [vmem:[%s566 + $0xc] sm:$0xf] %vm570, %v2798
      %2831 = vst.msk [vmem:[%s566 + $0x10] sm:$0xf] %vm570, %v2799
      %2832 = vst.msk [vmem:[%s566 + $0x14] sm:$0xf] %vm570, %v2800
      %2833 = vst.msk [vmem:[%s566 + $0x18] sm:$0xf] %vm570, %v2801
      %2834 = vst.msk [vmem:[%s566 + $0x1c] sm:$0xf] %vm570, %v2802
      %2835 = vst.msk [vmem:[%s566 + $0x20] sm:$0xf] %vm570, %v2803
      %2836 = vst.msk [vmem:[%s566 + $0x24] sm:$0xf] %vm570, %v2804
      %2837 = vst.msk [vmem:[%s566 + $0x28] sm:$0xf] %vm570, %v2805
      %2838 = vst.msk [vmem:[%s566 + $0x2c] sm:$0xf] %vm570, %v2806
      %2839 = vst.msk [vmem:[%s566 + $0x30] sm:$0xf] %vm570, %v2807
      %2840 = vst.msk [vmem:[%s566 + $0x34] sm:$0xf] %vm570, %v2808
      %2841 = vst.msk [vmem:[%s566 + $0x38] sm:$0xf] %vm570, %v2809
      %2842 = vst.msk [vmem:[%s566 + $0x3c] sm:$0xf] %vm570, %v2810
      %s2843 = smul.u32 8, %s25
      %p2844 = scmp.lt.s32.totalorder %s24, 1
      %s2845 = scalar_select %p2844, %s24, 1
      %p2846 = scmp.lt.s32.totalorder %s2843, 15
      %s2847 = scalar_select %p2846, %s2843, 15
      %s2848 = smul.addr %s2847, 2
      %s2849 = smul.addr %s2845, 32
      %s2850 = sadd.s32 %s2848, %s2849
      %s2851 = smul.addr %s2850, 4
      %s2852 = scalar_lea.vmem %s9, %s2851
      // Predicated region
      $region57: #{tpu_custom_call.1} parent=55 // pred_check
        %p2853 = pneg %p295
      $region58: #{tpu_custom_call.1} parent=55 // pred_check_branch
        %2855 = sbr.rel (%p2853) target = $region60
      $region59: #{tpu_custom_call.1} parent=55 // pred_region
        %s2856 = smul.u32 8, %s25
      $region60: #{tpu_custom_call.1} parent=55 // pred_fallthru
        _
    $region56: #{tpu_custom_call.1} parent=5 // pred_fallthru
      _
    %p2857 = scmp.le.s32.totalorder 2, %s15
    // Predicated region
    $region61: #{tpu_custom_call.1} parent=5 // pred_check
      %p2858 = pneg %p2857
    $region62: #{tpu_custom_call.1} parent=5 // pred_check_branch
      %2860 = sbr.rel (%p2858) target = $region64
    $region63: #{tpu_custom_call.1} parent=5 // pred_region
      %s2861 = ssub.s32 %s15, 2
      // Predicated region
      $region65: #{tpu_custom_call.1} parent=63 // pred_check
        %p2862 = pneg %p301
      $region66: #{tpu_custom_call.1} parent=63 // pred_check_branch
        %2864 = sbr.rel (%p2862) target = $region68
      $region67: #{tpu_custom_call.1} parent=63 // pred_region
        %s2865 = smul.u32 8, %s27
        %p2866 = scmp.lt.s32.totalorder %s26, 1
        %s2867 = scalar_select %p2866, %s26, 1
        %p2868 = scmp.lt.s32.totalorder %s2865, 15
        %s2869 = scalar_select %p2868, %s2865, 15
        %s2870 = smul.addr %s2869, 2
        %s2871 = smul.addr %s2867, 32
        %s2872 = sadd.s32 %s2870, %s2871
        %s2873 = smul.addr %s2872, 4
        %s2874 = scalar_lea.vmem %s9, %s2873
      $region68: #{tpu_custom_call.1} parent=63 // pred_fallthru
        _
    $region64: #{tpu_custom_call.1} parent=5 // pred_fallthru
      _
  $region6: #{tpu_custom_call.1} parent=0 // loop_footer
    %s19 = sadd.s32 1, %s15
  $region7: #{tpu_custom_call.1} parent=0 // loop_footer_branch
    %14 = sbr.rel target = $region3
  $region8: #{tpu_custom_call.1} parent=0 // loop_exit
    _

</llo_original>
